<compile_context>
chip_gen: v6e
topology: v6e:2x2x1
jax: 0.10.0
libtpu: 0.0.40
codegen_flags: <defaults>
</compile_context>

<pallas_src>
import functools

import jax
import jax.numpy as jnp
from jax import lax
from jax.experimental import pallas as pl
from jax.experimental.pallas import tpu as pltpu

LN_EPS = 1e-5


def _round_up(n, m):
    return ((n + m - 1) // m) * m


def _cdiv(a, b):
    return (a + b - 1) // b


def _chip_info():
    """Best-effort (vmem_capacity_bytes, num_tensorcores) for the local chip."""
    kind = ""
    try:
        kind = jax.devices()[0].device_kind.lower()
    except Exception:
        pass
    vmem = None
    try:
        vmem = int(pltpu.get_tpu_info().vmem_capacity_bytes)
    except Exception:
        vmem = None
    if vmem is None:
        vmem = (64 << 20) if "v7" in kind else (128 << 20)
    num_cores = 2 if "v7" in kind else 1
    return vmem, num_cores


# ----------------------------- kernel body -----------------------------------


def _block(x, w_ref, p_ref, true_n, residual):
    """LayerNorm(SiLU(x @ W + b)) [+ x] on in-VMEM values.

    x:     (TB, in_pad)  f32 activations (padding lanes exactly 0).
    w_ref: (in_pad, out_pad) bf16 weight (padded rows/cols zero).
    p_ref: (3, out_pad)  f32 packed params: row0=bias, row1=gamma, row2=beta.
           Padded columns are zero, so after normalization gamma=0/beta=0
           force the padding lanes back to exactly 0.
    true_n: true (unpadded) output width -> LayerNorm statistics divisor.
    """
    h = jnp.dot(x.astype(w_ref.dtype), w_ref[...],
                preferred_element_type=jnp.float32)        # MXU, f32 acc
    h = h + p_ref[0:1, :]                                   # bias
    h = h * jax.nn.sigmoid(h)                               # SiLU (EUP)

    # Single-pass LayerNorm stats over the TRUE width (padding lanes are 0).
    inv_n = 1.0 / float(true_n)
    s = jnp.sum(h, axis=-1, keepdims=True)
    ss = jnp.sum(h * h, axis=-1, keepdims=True)
    mean = s * inv_n
    var = jnp.maximum(ss * inv_n - mean * mean, 0.0)        # biased var (torch LN)
    h = (h - mean) * lax.rsqrt(var + LN_EPS)
    h = h * p_ref[1:2, :] + p_ref[2:3, :]                   # gamma / beta

    if residual:
        h = h + x
    return h


def _chain_kernel(x_ref, *refs, res_flags, true_dims):
    """Runs len(res_flags) residual blocks back-to-back on one batch tile."""
    o_ref = refs[-1]
    h = x_ref[...].astype(jnp.float32)
    for i, (res, tn) in enumerate(zip(res_flags, true_dims)):
        h = _block(h, refs[2 * i], refs[2 * i + 1], tn, residual=res)
    o_ref[...] = h.astype(o_ref.dtype)


# ----------------------------- host wrapper ----------------------------------


def _run_chain(xp, blocks, *, tb, batch_pad, in_pad, out_pad,
               res_flags, true_dims, vmem_limit, single_buffer_invariants):
    """One pallas_call running `blocks` (list of (w_bf16, packed_f32))."""
    const_map = lambda i: (0, 0)  # noqa: E731  (grid-invariant -> fetched once)
    inv_kwargs = ({"pipeline_mode": pl.Buffered(1)}
                  if single_buffer_invariants else {})

    flat = []
    in_specs = [pl.BlockSpec((tb, in_pad), lambda i: (i, 0))]
    for (wp, pp) in blocks:
        flat += [wp, pp]
        in_specs.append(pl.BlockSpec(wp.shape, const_map, **inv_kwargs))
        in_specs.append(pl.BlockSpec(pp.shape, const_map, **inv_kwargs))
    out_specs = pl.BlockSpec((tb, out_pad), lambda i: (i, 0))

    kernel = functools.partial(_chain_kernel, res_flags=tuple(res_flags),
                               true_dims=tuple(true_dims))

    flops = 2 * batch_pad * sum(w.shape[0] * w.shape[1] for w, _ in blocks)
    transcendentals = batch_pad * sum(w.shape[1] + 1 for w, _ in blocks)
    bytes_accessed = (int(xp.size) * xp.dtype.itemsize
                      + batch_pad * out_pad * 4
                      + sum(int(w.size) * w.dtype.itemsize + int(p.size) * 4
                            for w, p in blocks))

    return pl.pallas_call(
        kernel,
        out_shape=jax.ShapeDtypeStruct((batch_pad, out_pad), jnp.float32),
        grid=(batch_pad // tb,),
        in_specs=in_specs,
        out_specs=out_specs,
        compiler_params=pltpu.CompilerParams(
            dimension_semantics=("parallel",),
            vmem_limit_bytes=int(vmem_limit)),
        cost_estimate=pl.CostEstimate(flops=int(flops),
                                      transcendentals=int(transcendentals),
                                      bytes_accessed=int(bytes_accessed)),
    )(xp, *flat)


def vec2vec_adapter(x, params, input_dim, latent_dim, *,
                    batch_tile=None, mxu_dtype=jnp.bfloat16, force_split=False):
    """x: (batch, input_dim) f32 -> (batch, latent_dim) f32.

    params: list of 4 tuples (w:(din,dout), b:(1,dout), gamma:(1,dout), beta:(1,dout)).
    """
    batch = x.shape[0]
    lat, hid = latent_dim, 2 * latent_dim

    vmem_cap, num_cores = _chip_info()
    if batch_tile is None:
        # 512-wide tiles when 128 MiB VMEM (v5e/v6e), 256 on 64 MiB parts (v7x).
        batch_tile = 512 if vmem_cap >= (100 << 20) else 256

    # Lane-dense (multiple-of-128) feature padding.
    d_pad = _round_up(input_dim, 128)
    h_pad = _round_up(hid, 128)
    l_pad = _round_up(lat, 128)

    # Batch tiling: >=2 grid steps on 2-TC chips, minimal padding otherwise.
    min_tiles = min(num_cores, max(1, batch // 8))
    num_tiles = max(min_tiles, _cdiv(batch, batch_tile))
    tb = _round_up(_cdiv(batch, num_tiles), 8)
    batch_pad = num_tiles * tb

    xp = x.astype(jnp.float32)
    if batch_pad != batch or d_pad != input_dim:
        xp = jnp.zeros((batch_pad, d_pad), jnp.float32).at[
            :batch, :input_dim].set(xp)

    in_dims = [input_dim, hid, hid, lat]
    out_dims = [hid, hid, lat, lat]
    in_pads = [d_pad, h_pad, h_pad, l_pad]
    out_pads = [h_pad, h_pad, l_pad, l_pad]
    res_flags = [input_dim == hid, True, False, True]

    blocks = []
    for (w, b, g, be), di, do, dip, dop in zip(params, in_dims, out_dims,
                                               in_pads, out_pads):
        wp = jnp.zeros((dip, dop), mxu_dtype).at[:di, :do].set(w.astype(mxu_dtype))
        pp = jnp.zeros((3, dop), jnp.float32)
        pp = pp.at[0, :do].set(b.reshape(-1).astype(jnp.float32))   # bias
        pp = pp.at[1, :do].set(g.reshape(-1).astype(jnp.float32))   # gamma
        pp = pp.at[2, :do].set(be.reshape(-1).astype(jnp.float32))  # beta
        blocks.append((wp, pp))

    def footprint(idxs):
        """Resident bytes for one pallas_call covering blocks `idxs`."""
        wbytes = sum(in_pads[i] * out_pads[i] * 2       # bf16 weight, Buffered(1)
                     + 3 * out_pads[i] * 4              # packed params
                     for i in idxs)
        io = 2 * tb * (in_pads[idxs[0]] + out_pads[idxs[-1]]) * 4   # dbl-buffered
        live = tb * (in_pads[idxs[0]] + 2 * max(out_pads[i] for i in idxs)) * 4
        return wbytes + io + live + (4 << 20)           # + headroom

    budget = int(0.80 * vmem_cap)
    if force_split or footprint(range(4)) > budget:
        plans = [[0, 1], [2, 3]]
        # TODO(synk): if even a 2-block call exceeds the budget (very large
        # latent_dim on v7x), split per-block or add an N-tiling grid axis over
        # the (h_pad, h_pad) weight instead of keeping it resident.
    else:
        plans = [[0, 1, 2, 3]]

    h = xp
    for plan in plans:
        fp = footprint(plan)
        vmem_limit = min(max(fp, 32 << 20), int(0.85 * vmem_cap))
        run = functools.partial(
            _run_chain, h, [blocks[i] for i in plan],
            tb=tb, batch_pad=batch_pad,
            in_pad=in_pads[plan[0]], out_pad=out_pads[plan[-1]],
            res_flags=[res_flags[i] for i in plan],
            true_dims=[out_dims[i] for i in plan],
            vmem_limit=vmem_limit)
        try:
            h = run(single_buffer_invariants=True)
        except Exception:
            # Older Pallas versions may reject Buffered(1); fall back to the
            # default (double-buffered) invariant operands.
            h = run(single_buffer_invariants=False)

    if batch_pad == batch and l_pad == latent_dim:
        return h                      # identity slice avoided (no extra HBM pass)
    return h[:batch, :latent_dim]


# ----------------------------- reference & test -------------------------------


def init_params(key, input_dim, latent_dim):
    """Deterministic synthetic parameters; shapes mirror the PyTorch module."""
    dims = [(input_dim, 2 * latent_dim),
            (2 * latent_dim, 2 * latent_dim),
            (2 * latent_dim, latent_dim),
            (latent_dim, latent_dim)]
    params = []
    for (din, dout) in dims:
        key, k_w, k_b, k_g, k_be = jax.random.split(key, 5)
        scale = 1.0 / jnp.sqrt(jnp.float32(din))
        w = jax.random.uniform(k_w, (din, dout), jnp.float32, -scale, scale)
        b = jax.random.uniform(k_b, (1, dout), jnp.float32, -scale, scale)
        # LayerNorm affine params (torch defaults are ones/zeros; perturbed so
        # the affine path is exercised, still deterministic).
        g = 1.0 + 0.05 * jax.random.normal(k_g, (1, dout), jnp.float32)
        be = 0.05 * jax.random.normal(k_be, (1, dout), jnp.float32)
        params.append((w, b, g, be))
    return params


def vec2vec_reference(x, params, input_dim, latent_dim, *, mxu_dtype=jnp.bfloat16):
    """Pure-JAX reference mirroring the PyTorch forward (same bf16 MXU operands)."""
    def blk(xin, w, b, g, be, residual):
        h = jnp.dot(xin.astype(mxu_dtype), w.astype(mxu_dtype),
                    preferred_element_type=jnp.float32) + b
        h = h * jax.nn.sigmoid(h)
        mean = jnp.mean(h, axis=-1, keepdims=True)
        var = jnp.mean((h - mean) ** 2, axis=-1, keepdims=True)
        h = (h - mean) / jnp.sqrt(var + LN_EPS)
        h = h * g + be
        return h + xin if residual else h

    res_flags = [input_dim == 2 * latent_dim, True, False, True]
    h = x.astype(jnp.float32)
    for (w, b, g, be), r in zip(params, res_flags):
        h = blk(h, w, b, g, be, r)
    return h


if __name__ == "__main__":
    key = jax.random.PRNGKey(0)

    # (batch, input_dim, latent_dim, force_split):
    #   cfg 1: non-128 dims, res1=False (exercises LN masking / padding lanes)
    #   cfg 2: input_dim == 2*latent (exercises the block-1 residual path)
    #   cfg 3: forced two-call split (exercises the v7x large-weight plan)
    cases = [(32, 40, 24, False), (16, 48, 24, False), (64, 40, 24, True)]
    for (batch, input_dim, latent_dim, force_split) in cases:
        key, kx, kp = jax.random.split(key, 3)
        x = jax.random.normal(kx, (batch, input_dim), jnp.float32)
        params = init_params(kp, input_dim, latent_dim)

        out = jax.block_until_ready(
            vec2vec_adapter(x, params, input_dim, latent_dim,
                            force_split=force_split))
        ref = vec2vec_reference(x, params, input_dim, latent_dim)

        assert out.shape == (batch, latent_dim), out.shape
        err = float(jnp.max(jnp.abs(out - ref)))
        assert jnp.allclose(out, ref, atol=2e-3, rtol=2e-3), err

    print("KERNEL_OK")
</pallas_src>

<mosaic_0001>
module attributes {stable_mosaic.version = 11 : i64} {
  func.func @_chain_kernel(%arg0: i32, %arg1: memref<32x128xf32, #tpu.memory_space<vmem>>, %arg2: memref<128x128xbf16, #tpu.memory_space<vmem>>, %arg3: memref<3x128xf32, #tpu.memory_space<vmem>>, %arg4: memref<128x128xbf16, #tpu.memory_space<vmem>>, %arg5: memref<3x128xf32, #tpu.memory_space<vmem>>, %arg6: memref<128x128xbf16, #tpu.memory_space<vmem>>, %arg7: memref<3x128xf32, #tpu.memory_space<vmem>>, %arg8: memref<128x128xbf16, #tpu.memory_space<vmem>>, %arg9: memref<3x128xf32, #tpu.memory_space<vmem>>, %arg10: memref<32x128xf32, #tpu.memory_space<vmem>>) attributes {dimension_semantics = [#tpu.dimension_semantics<parallel>], iteration_bounds = array<i64: 1>, scalar_prefetch = 0 : i64, scratch_operands = 0 : i64, tpu.core_type = #tpu.core_type<tc>, window_params = [{transform_indices = @transform_0, window_bounds = array<i64: 32, 128>}, {pipeline_mode = #tpu.pipeline_mode<synchronous>, transform_indices = @transform_1, window_bounds = array<i64: 128, 128>}, {pipeline_mode = #tpu.pipeline_mode<synchronous>, transform_indices = @transform_2, window_bounds = array<i64: 3, 128>}, {pipeline_mode = #tpu.pipeline_mode<synchronous>, transform_indices = @transform_3, window_bounds = array<i64: 128, 128>}, {pipeline_mode = #tpu.pipeline_mode<synchronous>, transform_indices = @transform_4, window_bounds = array<i64: 3, 128>}, {pipeline_mode = #tpu.pipeline_mode<synchronous>, transform_indices = @transform_5, window_bounds = array<i64: 128, 128>}, {pipeline_mode = #tpu.pipeline_mode<synchronous>, transform_indices = @transform_6, window_bounds = array<i64: 3, 128>}, {pipeline_mode = #tpu.pipeline_mode<synchronous>, transform_indices = @transform_7, window_bounds = array<i64: 128, 128>}, {pipeline_mode = #tpu.pipeline_mode<synchronous>, transform_indices = @transform_8, window_bounds = array<i64: 3, 128>}, {transform_indices = @transform_9, window_bounds = array<i64: 32, 128>}]} {
    %c0 = arith.constant 0 : index
    %c0_0 = arith.constant 0 : index
    %0 = vector.load %arg1[%c0, %c0_0] : memref<32x128xf32, #tpu.memory_space<vmem>>, vector<32x128xf32>
    %1 = arith.truncf %0 : vector<32x128xf32> to vector<32x128xbf16>
    %c0_1 = arith.constant 0 : index
    %c0_2 = arith.constant 0 : index
    %2 = vector.load %arg2[%c0_1, %c0_2] : memref<128x128xbf16, #tpu.memory_space<vmem>>, vector<128x128xbf16>
    %cst = arith.constant dense<0.000000e+00> : vector<32x128xf32>
    %3 = tpu.matmul %1, %2, %cst {dimension_numbers = #tpu.dot_dimension_numbers<[1], [0], [0], [1], [0, 0, 1, 1], [], []>} : vector<32x128xbf16>, vector<128x128xbf16>, vector<32x128xf32> -> vector<32x128xf32>
    %c0_3 = arith.constant 0 : index
    %c0_4 = arith.constant 0 : index
    %4 = vector.load %arg3[%c0_3, %c0_4] : memref<3x128xf32, #tpu.memory_space<vmem>>, vector<1x128xf32>
    %5 = vector.broadcast %4 : vector<1x128xf32> to vector<32x128xf32>
    %6 = arith.addf %3, %5 : vector<32x128xf32>
    %7 = arith.negf %6 : vector<32x128xf32>
    %8 = math.exp %7 : vector<32x128xf32>
    %cst_5 = arith.constant 1.000000e+00 : f32
    %9 = vector.broadcast %cst_5 : f32 to vector<32x128xf32>
    %10 = arith.addf %9, %8 : vector<32x128xf32>
    %11 = arith.divf %9, %10 : vector<32x128xf32>
    %12 = arith.mulf %6, %11 : vector<32x128xf32>
    %cst_6 = arith.constant dense<0.000000e+00> : vector<32xf32>
    %13 = vector.multi_reduction <add>, %12, %cst_6 [1] : vector<32x128xf32> to vector<32xf32>
    %14 = vector.shape_cast %13 : vector<32xf32> to vector<32x1xf32>
    %15 = arith.mulf %12, %12 : vector<32x128xf32>
    %cst_7 = arith.constant dense<0.000000e+00> : vector<32xf32>
    %16 = vector.multi_reduction <add>, %15, %cst_7 [1] : vector<32x128xf32> to vector<32xf32>
    %17 = vector.shape_cast %16 : vector<32xf32> to vector<32x1xf32>
    %cst_8 = arith.constant 0.020833334 : f32
    %18 = vector.broadcast %cst_8 : f32 to vector<32x1xf32>
    %19 = arith.mulf %14, %18 : vector<32x1xf32>
    %cst_9 = arith.constant 0.020833334 : f32
    %20 = vector.broadcast %cst_9 : f32 to vector<32x1xf32>
    %21 = arith.mulf %17, %20 : vector<32x1xf32>
    %22 = arith.mulf %19, %19 : vector<32x1xf32>
    %23 = arith.subf %21, %22 : vector<32x1xf32>
    %cst_10 = arith.constant 0.000000e+00 : f32
    %24 = vector.broadcast %cst_10 : f32 to vector<32x1xf32>
    %25 = arith.maximumf %23, %24 : vector<32x1xf32>
    %26 = vector.broadcast %19 : vector<32x1xf32> to vector<32x128xf32>
    %27 = arith.subf %12, %26 : vector<32x128xf32>
    %cst_11 = arith.constant 9.99999974E-6 : f32
    %28 = vector.broadcast %cst_11 : f32 to vector<32x1xf32>
    %29 = arith.addf %25, %28 : vector<32x1xf32>
    %30 = math.rsqrt %29 : vector<32x1xf32>
    %31 = vector.broadcast %30 : vector<32x1xf32> to vector<32x128xf32>
    %32 = arith.mulf %27, %31 : vector<32x128xf32>
    %c1 = arith.constant 1 : index
    %c0_12 = arith.constant 0 : index
    %33 = vector.load %arg3[%c1, %c0_12] : memref<3x128xf32, #tpu.memory_space<vmem>>, vector<1x128xf32>
    %34 = vector.broadcast %33 : vector<1x128xf32> to vector<32x128xf32>
    %35 = arith.mulf %32, %34 : vector<32x128xf32>
    %c2 = arith.constant 2 : index
    %c0_13 = arith.constant 0 : index
    %36 = vector.load %arg3[%c2, %c0_13] : memref<3x128xf32, #tpu.memory_space<vmem>>, vector<1x128xf32>
    %37 = vector.broadcast %36 : vector<1x128xf32> to vector<32x128xf32>
    %38 = arith.addf %35, %37 : vector<32x128xf32>
    %39 = arith.truncf %38 : vector<32x128xf32> to vector<32x128xbf16>
    %c0_14 = arith.constant 0 : index
    %c0_15 = arith.constant 0 : index
    %40 = vector.load %arg4[%c0_14, %c0_15] : memref<128x128xbf16, #tpu.memory_space<vmem>>, vector<128x128xbf16>
    %cst_16 = arith.constant dense<0.000000e+00> : vector<32x128xf32>
    %41 = tpu.matmul %39, %40, %cst_16 {dimension_numbers = #tpu.dot_dimension_numbers<[1], [0], [0], [1], [0, 0, 1, 1], [], []>} : vector<32x128xbf16>, vector<128x128xbf16>, vector<32x128xf32> -> vector<32x128xf32>
    %c0_17 = arith.constant 0 : index
    %c0_18 = arith.constant 0 : index
    %42 = vector.load %arg5[%c0_17, %c0_18] : memref<3x128xf32, #tpu.memory_space<vmem>>, vector<1x128xf32>
    %43 = vector.broadcast %42 : vector<1x128xf32> to vector<32x128xf32>
    %44 = arith.addf %41, %43 : vector<32x128xf32>
    %45 = arith.negf %44 : vector<32x128xf32>
    %46 = math.exp %45 : vector<32x128xf32>
    %cst_19 = arith.constant 1.000000e+00 : f32
    %47 = vector.broadcast %cst_19 : f32 to vector<32x128xf32>
    %48 = arith.addf %47, %46 : vector<32x128xf32>
    %49 = arith.divf %47, %48 : vector<32x128xf32>
    %50 = arith.mulf %44, %49 : vector<32x128xf32>
    %cst_20 = arith.constant dense<0.000000e+00> : vector<32xf32>
    %51 = vector.multi_reduction <add>, %50, %cst_20 [1] : vector<32x128xf32> to vector<32xf32>
    %52 = vector.shape_cast %51 : vector<32xf32> to vector<32x1xf32>
    %53 = arith.mulf %50, %50 : vector<32x128xf32>
    %cst_21 = arith.constant dense<0.000000e+00> : vector<32xf32>
    %54 = vector.multi_reduction <add>, %53, %cst_21 [1] : vector<32x128xf32> to vector<32xf32>
    %55 = vector.shape_cast %54 : vector<32xf32> to vector<32x1xf32>
    %cst_22 = arith.constant 0.020833334 : f32
    %56 = vector.broadcast %cst_22 : f32 to vector<32x1xf32>
    %57 = arith.mulf %52, %56 : vector<32x1xf32>
    %cst_23 = arith.constant 0.020833334 : f32
    %58 = vector.broadcast %cst_23 : f32 to vector<32x1xf32>
    %59 = arith.mulf %55, %58 : vector<32x1xf32>
    %60 = arith.mulf %57, %57 : vector<32x1xf32>
    %61 = arith.subf %59, %60 : vector<32x1xf32>
    %cst_24 = arith.constant 0.000000e+00 : f32
    %62 = vector.broadcast %cst_24 : f32 to vector<32x1xf32>
    %63 = arith.maximumf %61, %62 : vector<32x1xf32>
    %64 = vector.broadcast %57 : vector<32x1xf32> to vector<32x128xf32>
    %65 = arith.subf %50, %64 : vector<32x128xf32>
    %cst_25 = arith.constant 9.99999974E-6 : f32
    %66 = vector.broadcast %cst_25 : f32 to vector<32x1xf32>
    %67 = arith.addf %63, %66 : vector<32x1xf32>
    %68 = math.rsqrt %67 : vector<32x1xf32>
    %69 = vector.broadcast %68 : vector<32x1xf32> to vector<32x128xf32>
    %70 = arith.mulf %65, %69 : vector<32x128xf32>
    %c1_26 = arith.constant 1 : index
    %c0_27 = arith.constant 0 : index
    %71 = vector.load %arg5[%c1_26, %c0_27] : memref<3x128xf32, #tpu.memory_space<vmem>>, vector<1x128xf32>
    %72 = vector.broadcast %71 : vector<1x128xf32> to vector<32x128xf32>
    %73 = arith.mulf %70, %72 : vector<32x128xf32>
    %c2_28 = arith.constant 2 : index
    %c0_29 = arith.constant 0 : index
    %74 = vector.load %arg5[%c2_28, %c0_29] : memref<3x128xf32, #tpu.memory_space<vmem>>, vector<1x128xf32>
    %75 = vector.broadcast %74 : vector<1x128xf32> to vector<32x128xf32>
    %76 = arith.addf %73, %75 : vector<32x128xf32>
    %77 = arith.addf %76, %38 : vector<32x128xf32>
    %78 = arith.truncf %77 : vector<32x128xf32> to vector<32x128xbf16>
    %c0_30 = arith.constant 0 : index
    %c0_31 = arith.constant 0 : index
    %79 = vector.load %arg6[%c0_30, %c0_31] : memref<128x128xbf16, #tpu.memory_space<vmem>>, vector<128x128xbf16>
    %cst_32 = arith.constant dense<0.000000e+00> : vector<32x128xf32>
    %80 = tpu.matmul %78, %79, %cst_32 {dimension_numbers = #tpu.dot_dimension_numbers<[1], [0], [0], [1], [0, 0, 1, 1], [], []>} : vector<32x128xbf16>, vector<128x128xbf16>, vector<32x128xf32> -> vector<32x128xf32>
    %c0_33 = arith.constant 0 : index
    %c0_34 = arith.constant 0 : index
    %81 = vector.load %arg7[%c0_33, %c0_34] : memref<3x128xf32, #tpu.memory_space<vmem>>, vector<1x128xf32>
    %82 = vector.broadcast %81 : vector<1x128xf32> to vector<32x128xf32>
    %83 = arith.addf %80, %82 : vector<32x128xf32>
    %84 = arith.negf %83 : vector<32x128xf32>
    %85 = math.exp %84 : vector<32x128xf32>
    %cst_35 = arith.constant 1.000000e+00 : f32
    %86 = vector.broadcast %cst_35 : f32 to vector<32x128xf32>
    %87 = arith.addf %86, %85 : vector<32x128xf32>
    %88 = arith.divf %86, %87 : vector<32x128xf32>
    %89 = arith.mulf %83, %88 : vector<32x128xf32>
    %cst_36 = arith.constant dense<0.000000e+00> : vector<32xf32>
    %90 = vector.multi_reduction <add>, %89, %cst_36 [1] : vector<32x128xf32> to vector<32xf32>
    %91 = vector.shape_cast %90 : vector<32xf32> to vector<32x1xf32>
    %92 = arith.mulf %89, %89 : vector<32x128xf32>
    %cst_37 = arith.constant dense<0.000000e+00> : vector<32xf32>
    %93 = vector.multi_reduction <add>, %92, %cst_37 [1] : vector<32x128xf32> to vector<32xf32>
    %94 = vector.shape_cast %93 : vector<32xf32> to vector<32x1xf32>
    %cst_38 = arith.constant 0.0416666679 : f32
    %95 = vector.broadcast %cst_38 : f32 to vector<32x1xf32>
    %96 = arith.mulf %91, %95 : vector<32x1xf32>
    %cst_39 = arith.constant 0.0416666679 : f32
    %97 = vector.broadcast %cst_39 : f32 to vector<32x1xf32>
    %98 = arith.mulf %94, %97 : vector<32x1xf32>
    %99 = arith.mulf %96, %96 : vector<32x1xf32>
    %100 = arith.subf %98, %99 : vector<32x1xf32>
    %cst_40 = arith.constant 0.000000e+00 : f32
    %101 = vector.broadcast %cst_40 : f32 to vector<32x1xf32>
    %102 = arith.maximumf %100, %101 : vector<32x1xf32>
    %103 = vector.broadcast %96 : vector<32x1xf32> to vector<32x128xf32>
    %104 = arith.subf %89, %103 : vector<32x128xf32>
    %cst_41 = arith.constant 9.99999974E-6 : f32
    %105 = vector.broadcast %cst_41 : f32 to vector<32x1xf32>
    %106 = arith.addf %102, %105 : vector<32x1xf32>
    %107 = math.rsqrt %106 : vector<32x1xf32>
    %108 = vector.broadcast %107 : vector<32x1xf32> to vector<32x128xf32>
    %109 = arith.mulf %104, %108 : vector<32x128xf32>
    %c1_42 = arith.constant 1 : index
    %c0_43 = arith.constant 0 : index
    %110 = vector.load %arg7[%c1_42, %c0_43] : memref<3x128xf32, #tpu.memory_space<vmem>>, vector<1x128xf32>
    %111 = vector.broadcast %110 : vector<1x128xf32> to vector<32x128xf32>
    %112 = arith.mulf %109, %111 : vector<32x128xf32>
    %c2_44 = arith.constant 2 : index
    %c0_45 = arith.constant 0 : index
    %113 = vector.load %arg7[%c2_44, %c0_45] : memref<3x128xf32, #tpu.memory_space<vmem>>, vector<1x128xf32>
    %114 = vector.broadcast %113 : vector<1x128xf32> to vector<32x128xf32>
    %115 = arith.addf %112, %114 : vector<32x128xf32>
    %116 = arith.truncf %115 : vector<32x128xf32> to vector<32x128xbf16>
    %c0_46 = arith.constant 0 : index
    %c0_47 = arith.constant 0 : index
    %117 = vector.load %arg8[%c0_46, %c0_47] : memref<128x128xbf16, #tpu.memory_space<vmem>>, vector<128x128xbf16>
    %cst_48 = arith.constant dense<0.000000e+00> : vector<32x128xf32>
    %118 = tpu.matmul %116, %117, %cst_48 {dimension_numbers = #tpu.dot_dimension_numbers<[1], [0], [0], [1], [0, 0, 1, 1], [], []>} : vector<32x128xbf16>, vector<128x128xbf16>, vector<32x128xf32> -> vector<32x128xf32>
    %c0_49 = arith.constant 0 : index
    %c0_50 = arith.constant 0 : index
    %119 = vector.load %arg9[%c0_49, %c0_50] : memref<3x128xf32, #tpu.memory_space<vmem>>, vector<1x128xf32>
    %120 = vector.broadcast %119 : vector<1x128xf32> to vector<32x128xf32>
    %121 = arith.addf %118, %120 : vector<32x128xf32>
    %122 = arith.negf %121 : vector<32x128xf32>
    %123 = math.exp %122 : vector<32x128xf32>
    %cst_51 = arith.constant 1.000000e+00 : f32
    %124 = vector.broadcast %cst_51 : f32 to vector<32x128xf32>
    %125 = arith.addf %124, %123 : vector<32x128xf32>
    %126 = arith.divf %124, %125 : vector<32x128xf32>
    %127 = arith.mulf %121, %126 : vector<32x128xf32>
    %cst_52 = arith.constant dense<0.000000e+00> : vector<32xf32>
    %128 = vector.multi_reduction <add>, %127, %cst_52 [1] : vector<32x128xf32> to vector<32xf32>
    %129 = vector.shape_cast %128 : vector<32xf32> to vector<32x1xf32>
    %130 = arith.mulf %127, %127 : vector<32x128xf32>
    %cst_53 = arith.constant dense<0.000000e+00> : vector<32xf32>
    %131 = vector.multi_reduction <add>, %130, %cst_53 [1] : vector<32x128xf32> to vector<32xf32>
    %132 = vector.shape_cast %131 : vector<32xf32> to vector<32x1xf32>
    %cst_54 = arith.constant 0.0416666679 : f32
    %133 = vector.broadcast %cst_54 : f32 to vector<32x1xf32>
    %134 = arith.mulf %129, %133 : vector<32x1xf32>
    %cst_55 = arith.constant 0.0416666679 : f32
    %135 = vector.broadcast %cst_55 : f32 to vector<32x1xf32>
    %136 = arith.mulf %132, %135 : vector<32x1xf32>
    %137 = arith.mulf %134, %134 : vector<32x1xf32>
    %138 = arith.subf %136, %137 : vector<32x1xf32>
    %cst_56 = arith.constant 0.000000e+00 : f32
    %139 = vector.broadcast %cst_56 : f32 to vector<32x1xf32>
    %140 = arith.maximumf %138, %139 : vector<32x1xf32>
    %141 = vector.broadcast %134 : vector<32x1xf32> to vector<32x128xf32>
    %142 = arith.subf %127, %141 : vector<32x128xf32>
    %cst_57 = arith.constant 9.99999974E-6 : f32
    %143 = vector.broadcast %cst_57 : f32 to vector<32x1xf32>
    %144 = arith.addf %140, %143 : vector<32x1xf32>
    %145 = math.rsqrt %144 : vector<32x1xf32>
    %146 = vector.broadcast %145 : vector<32x1xf32> to vector<32x128xf32>
    %147 = arith.mulf %142, %146 : vector<32x128xf32>
    %c1_58 = arith.constant 1 : index
    %c0_59 = arith.constant 0 : index
    %148 = vector.load %arg9[%c1_58, %c0_59] : memref<3x128xf32, #tpu.memory_space<vmem>>, vector<1x128xf32>
    %149 = vector.broadcast %148 : vector<1x128xf32> to vector<32x128xf32>
    %150 = arith.mulf %147, %149 : vector<32x128xf32>
    %c2_60 = arith.constant 2 : index
    %c0_61 = arith.constant 0 : index
    %151 = vector.load %arg9[%c2_60, %c0_61] : memref<3x128xf32, #tpu.memory_space<vmem>>, vector<1x128xf32>
    %152 = vector.broadcast %151 : vector<1x128xf32> to vector<32x128xf32>
    %153 = arith.addf %150, %152 : vector<32x128xf32>
    %154 = arith.addf %153, %115 : vector<32x128xf32>
    %c0_62 = arith.constant 0 : index
    %c0_63 = arith.constant 0 : index
    %155 = vector.load %arg10[%c0_62, %c0_63] : memref<32x128xf32, #tpu.memory_space<vmem>>, vector<32x128xf32>
    tpu.vector_store %arg10[%c0_62, %c0_63], %154 {strides = array<i32>} : memref<32x128xf32, #tpu.memory_space<vmem>>, vector<32x128xf32>,
    return
  }
  func.func @transform_0(%arg0: i32) -> (i32, i32) {
    %c0_i32 = arith.constant 0 : i32
    %c0_i32_0 = arith.constant 0 : i32
    return %arg0, %c0_i32 : i32, i32
  }
  func.func @transform_1(%arg0: i32) -> (i32, i32) {
    %c0_i32 = arith.constant 0 : i32
    %c0_i32_0 = arith.constant 0 : i32
    %c0_i32_1 = arith.constant 0 : i32
    return %c0_i32, %c0_i32_0 : i32, i32
  }
  func.func @transform_2(%arg0: i32) -> (i32, i32) {
    %c0_i32 = arith.constant 0 : i32
    %c0_i32_0 = arith.constant 0 : i32
    %c0_i32_1 = arith.constant 0 : i32
    return %c0_i32, %c0_i32_0 : i32, i32
  }
  func.func @transform_3(%arg0: i32) -> (i32, i32) {
    %c0_i32 = arith.constant 0 : i32
    %c0_i32_0 = arith.constant 0 : i32
    %c0_i32_1 = arith.constant 0 : i32
    return %c0_i32, %c0_i32_0 : i32, i32
  }
  func.func @transform_4(%arg0: i32) -> (i32, i32) {
    %c0_i32 = arith.constant 0 : i32
    %c0_i32_0 = arith.constant 0 : i32
    %c0_i32_1 = arith.constant 0 : i32
    return %c0_i32, %c0_i32_0 : i32, i32
  }
  func.func @transform_5(%arg0: i32) -> (i32, i32) {
    %c0_i32 = arith.constant 0 : i32
    %c0_i32_0 = arith.constant 0 : i32
    %c0_i32_1 = arith.constant 0 : i32
    return %c0_i32, %c0_i32_0 : i32, i32
  }
  func.func @transform_6(%arg0: i32) -> (i32, i32) {
    %c0_i32 = arith.constant 0 : i32
    %c0_i32_0 = arith.constant 0 : i32
    %c0_i32_1 = arith.constant 0 : i32
    return %c0_i32, %c0_i32_0 : i32, i32
  }
  func.func @transform_7(%arg0: i32) -> (i32, i32) {
    %c0_i32 = arith.constant 0 : i32
    %c0_i32_0 = arith.constant 0 : i32
    %c0_i32_1 = arith.constant 0 : i32
    return %c0_i32, %c0_i32_0 : i32, i32
  }
  func.func @transform_8(%arg0: i32) -> (i32, i32) {
    %c0_i32 = arith.constant 0 : i32
    %c0_i32_0 = arith.constant 0 : i32
    %c0_i32_1 = arith.constant 0 : i32
    return %c0_i32, %c0_i32_0 : i32, i32
  }
  func.func @transform_9(%arg0: i32) -> (i32, i32) {
    %c0_i32 = arith.constant 0 : i32
    %c0_i32_0 = arith.constant 0 : i32
    return %arg0, %c0_i32 : i32, i32
  }
}

module attributes {stable_mosaic.version = 11 : i64} {
  func.func @_chain_kernel(%arg0: i32, %arg1: memref<32x128xf32, #tpu.memory_space<vmem>>, %arg2: memref<128x128xbf16, #tpu.memory_space<vmem>>, %arg3: memref<3x128xf32, #tpu.memory_space<vmem>>, %arg4: memref<128x128xbf16, #tpu.memory_space<vmem>>, %arg5: memref<3x128xf32, #tpu.memory_space<vmem>>, %arg6: memref<128x128xbf16, #tpu.memory_space<vmem>>, %arg7: memref<3x128xf32, #tpu.memory_space<vmem>>, %arg8: memref<128x128xbf16, #tpu.memory_space<vmem>>, %arg9: memref<3x128xf32, #tpu.memory_space<vmem>>, %arg10: memref<32x128xf32, #tpu.memory_space<vmem>>) attributes {dimension_semantics = [#tpu.dimension_semantics<parallel>], iteration_bounds = array<i64: 1>, scalar_prefetch = 0 : i64, scratch_operands = 0 : i64, tpu.core_type = #tpu.core_type<tc>, window_params = [{transform_indices = @transform_0, window_bounds = array<i64: 32, 128>}, {pipeline_mode = #tpu.pipeline_mode<synchronous>, transform_indices = @transform_1, window_bounds = array<i64: 128, 128>}, {pipeline_mode = #tpu.pipeline_mode<synchronous>, transform_indices = @transform_2, window_bounds = array<i64: 3, 128>}, {pipeline_mode = #tpu.pipeline_mode<synchronous>, transform_indices = @transform_3, window_bounds = array<i64: 128, 128>}, {pipeline_mode = #tpu.pipeline_mode<synchronous>, transform_indices = @transform_4, window_bounds = array<i64: 3, 128>}, {pipeline_mode = #tpu.pipeline_mode<synchronous>, transform_indices = @transform_5, window_bounds = array<i64: 128, 128>}, {pipeline_mode = #tpu.pipeline_mode<synchronous>, transform_indices = @transform_6, window_bounds = array<i64: 3, 128>}, {pipeline_mode = #tpu.pipeline_mode<synchronous>, transform_indices = @transform_7, window_bounds = array<i64: 128, 128>}, {pipeline_mode = #tpu.pipeline_mode<synchronous>, transform_indices = @transform_8, window_bounds = array<i64: 3, 128>}, {transform_indices = @transform_9, window_bounds = array<i64: 32, 128>}]} {
    %c0 = arith.constant 0 : index
    %c0_0 = arith.constant 0 : index
    %0 = vector.load %arg1[%c0, %c0_0] : memref<32x128xf32, #tpu.memory_space<vmem>>, vector<32x128xf32>
    %1 = arith.truncf %0 : vector<32x128xf32> to vector<32x128xbf16>
    %c0_1 = arith.constant 0 : index
    %c0_2 = arith.constant 0 : index
    %2 = vector.load %arg2[%c0_1, %c0_2] : memref<128x128xbf16, #tpu.memory_space<vmem>>, vector<128x128xbf16>
    %cst = arith.constant dense<0.000000e+00> : vector<32x128xf32>
    %3 = tpu.matmul %1, %2, %cst {dimension_numbers = #tpu.dot_dimension_numbers<[1], [0], [0], [1], [0, 0, 1, 1], [], []>} : vector<32x128xbf16>, vector<128x128xbf16>, vector<32x128xf32> -> vector<32x128xf32>
    %c0_3 = arith.constant 0 : index
    %c0_4 = arith.constant 0 : index
    %4 = vector.load %arg3[%c0_3, %c0_4] : memref<3x128xf32, #tpu.memory_space<vmem>>, vector<1x128xf32>
    %5 = vector.broadcast %4 : vector<1x128xf32> to vector<32x128xf32>
    %6 = arith.addf %3, %5 : vector<32x128xf32>
    %7 = arith.negf %6 : vector<32x128xf32>
    %8 = math.exp %7 : vector<32x128xf32>
    %cst_5 = arith.constant 1.000000e+00 : f32
    %9 = vector.broadcast %cst_5 : f32 to vector<32x128xf32>
    %10 = arith.addf %9, %8 : vector<32x128xf32>
    %11 = arith.divf %9, %10 : vector<32x128xf32>
    %12 = arith.mulf %6, %11 : vector<32x128xf32>
    %cst_6 = arith.constant dense<0.000000e+00> : vector<32xf32>
    %13 = vector.multi_reduction <add>, %12, %cst_6 [1] : vector<32x128xf32> to vector<32xf32>
    %14 = vector.shape_cast %13 : vector<32xf32> to vector<32x1xf32>
    %15 = arith.mulf %12, %12 : vector<32x128xf32>
    %cst_7 = arith.constant dense<0.000000e+00> : vector<32xf32>
    %16 = vector.multi_reduction <add>, %15, %cst_7 [1] : vector<32x128xf32> to vector<32xf32>
    %17 = vector.shape_cast %16 : vector<32xf32> to vector<32x1xf32>
    %cst_8 = arith.constant 0.020833334 : f32
    %18 = vector.broadcast %cst_8 : f32 to vector<32x1xf32>
    %19 = arith.mulf %14, %18 : vector<32x1xf32>
    %cst_9 = arith.constant 0.020833334 : f32
    %20 = vector.broadcast %cst_9 : f32 to vector<32x1xf32>
    %21 = arith.mulf %17, %20 : vector<32x1xf32>
    %22 = arith.mulf %19, %19 : vector<32x1xf32>
    %23 = arith.subf %21, %22 : vector<32x1xf32>
    %cst_10 = arith.constant 0.000000e+00 : f32
    %24 = vector.broadcast %cst_10 : f32 to vector<32x1xf32>
    %25 = arith.maximumf %23, %24 : vector<32x1xf32>
    %26 = vector.broadcast %19 : vector<32x1xf32> to vector<32x128xf32>
    %27 = arith.subf %12, %26 : vector<32x128xf32>
    %cst_11 = arith.constant 9.99999974E-6 : f32
    %28 = vector.broadcast %cst_11 : f32 to vector<32x1xf32>
    %29 = arith.addf %25, %28 : vector<32x1xf32>
    %30 = math.rsqrt %29 : vector<32x1xf32>
    %31 = vector.broadcast %30 : vector<32x1xf32> to vector<32x128xf32>
    %32 = arith.mulf %27, %31 : vector<32x128xf32>
    %c1 = arith.constant 1 : index
    %c0_12 = arith.constant 0 : index
    %33 = vector.load %arg3[%c1, %c0_12] : memref<3x128xf32, #tpu.memory_space<vmem>>, vector<1x128xf32>
    %34 = vector.broadcast %33 : vector<1x128xf32> to vector<32x128xf32>
    %35 = arith.mulf %32, %34 : vector<32x128xf32>
    %c2 = arith.constant 2 : index
    %c0_13 = arith.constant 0 : index
    %36 = vector.load %arg3[%c2, %c0_13] : memref<3x128xf32, #tpu.memory_space<vmem>>, vector<1x128xf32>
    %37 = vector.broadcast %36 : vector<1x128xf32> to vector<32x128xf32>
    %38 = arith.addf %35, %37 : vector<32x128xf32>
    %39 = arith.truncf %38 : vector<32x128xf32> to vector<32x128xbf16>
    %c0_14 = arith.constant 0 : index
    %c0_15 = arith.constant 0 : index
    %40 = vector.load %arg4[%c0_14, %c0_15] : memref<128x128xbf16, #tpu.memory_space<vmem>>, vector<128x128xbf16>
    %cst_16 = arith.constant dense<0.000000e+00> : vector<32x128xf32>
    %41 = tpu.matmul %39, %40, %cst_16 {dimension_numbers = #tpu.dot_dimension_numbers<[1], [0], [0], [1], [0, 0, 1, 1], [], []>} : vector<32x128xbf16>, vector<128x128xbf16>, vector<32x128xf32> -> vector<32x128xf32>
    %c0_17 = arith.constant 0 : index
    %c0_18 = arith.constant 0 : index
    %42 = vector.load %arg5[%c0_17, %c0_18] : memref<3x128xf32, #tpu.memory_space<vmem>>, vector<1x128xf32>
    %43 = vector.broadcast %42 : vector<1x128xf32> to vector<32x128xf32>
    %44 = arith.addf %41, %43 : vector<32x128xf32>
    %45 = arith.negf %44 : vector<32x128xf32>
    %46 = math.exp %45 : vector<32x128xf32>
    %cst_19 = arith.constant 1.000000e+00 : f32
    %47 = vector.broadcast %cst_19 : f32 to vector<32x128xf32>
    %48 = arith.addf %47, %46 : vector<32x128xf32>
    %49 = arith.divf %47, %48 : vector<32x128xf32>
    %50 = arith.mulf %44, %49 : vector<32x128xf32>
    %cst_20 = arith.constant dense<0.000000e+00> : vector<32xf32>
    %51 = vector.multi_reduction <add>, %50, %cst_20 [1] : vector<32x128xf32> to vector<32xf32>
    %52 = vector.shape_cast %51 : vector<32xf32> to vector<32x1xf32>
    %53 = arith.mulf %50, %50 : vector<32x128xf32>
    %cst_21 = arith.constant dense<0.000000e+00> : vector<32xf32>
    %54 = vector.multi_reduction <add>, %53, %cst_21 [1] : vector<32x128xf32> to vector<32xf32>
    %55 = vector.shape_cast %54 : vector<32xf32> to vector<32x1xf32>
    %cst_22 = arith.constant 0.020833334 : f32
    %56 = vector.broadcast %cst_22 : f32 to vector<32x1xf32>
    %57 = arith.mulf %52, %56 : vector<32x1xf32>
    %cst_23 = arith.constant 0.020833334 : f32
    %58 = vector.broadcast %cst_23 : f32 to vector<32x1xf32>
    %59 = arith.mulf %55, %58 : vector<32x1xf32>
    %60 = arith.mulf %57, %57 : vector<32x1xf32>
    %61 = arith.subf %59, %60 : vector<32x1xf32>
    %cst_24 = arith.constant 0.000000e+00 : f32
    %62 = vector.broadcast %cst_24 : f32 to vector<32x1xf32>
    %63 = arith.maximumf %61, %62 : vector<32x1xf32>
    %64 = vector.broadcast %57 : vector<32x1xf32> to vector<32x128xf32>
    %65 = arith.subf %50, %64 : vector<32x128xf32>
    %cst_25 = arith.constant 9.99999974E-6 : f32
    %66 = vector.broadcast %cst_25 : f32 to vector<32x1xf32>
    %67 = arith.addf %63, %66 : vector<32x1xf32>
    %68 = math.rsqrt %67 : vector<32x1xf32>
    %69 = vector.broadcast %68 : vector<32x1xf32> to vector<32x128xf32>
    %70 = arith.mulf %65, %69 : vector<32x128xf32>
    %c1_26 = arith.constant 1 : index
    %c0_27 = arith.constant 0 : index
    %71 = vector.load %arg5[%c1_26, %c0_27] : memref<3x128xf32, #tpu.memory_space<vmem>>, vector<1x128xf32>
    %72 = vector.broadcast %71 : vector<1x128xf32> to vector<32x128xf32>
    %73 = arith.mulf %70, %72 : vector<32x128xf32>
    %c2_28 = arith.constant 2 : index
    %c0_29 = arith.constant 0 : index
    %74 = vector.load %arg5[%c2_28, %c0_29] : memref<3x128xf32, #tpu.memory_space<vmem>>, vector<1x128xf32>
    %75 = vector.broadcast %74 : vector<1x128xf32> to vector<32x128xf32>
    %76 = arith.addf %73, %75 : vector<32x128xf32>
    %77 = arith.addf %76, %38 : vector<32x128xf32>
    %78 = arith.truncf %77 : vector<32x128xf32> to vector<32x128xbf16>
    %c0_30 = arith.constant 0 : index
    %c0_31 = arith.constant 0 : index
    %79 = vector.load %arg6[%c0_30, %c0_31] : memref<128x128xbf16, #tpu.memory_space<vmem>>, vector<128x128xbf16>
    %cst_32 = arith.constant dense<0.000000e+00> : vector<32x128xf32>
    %80 = tpu.matmul %78, %79, %cst_32 {dimension_numbers = #tpu.dot_dimension_numbers<[1], [0], [0], [1], [0, 0, 1, 1], [], []>} : vector<32x128xbf16>, vector<128x128xbf16>, vector<32x128xf32> -> vector<32x128xf32>
    %c0_33 = arith.constant 0 : index
    %c0_34 = arith.constant 0 : index
    %81 = vector.load %arg7[%c0_33, %c0_34] : memref<3x128xf32, #tpu.memory_space<vmem>>, vector<1x128xf32>
    %82 = vector.broadcast %81 : vector<1x128xf32> to vector<32x128xf32>
    %83 = arith.addf %80, %82 : vector<32x128xf32>
    %84 = arith.negf %83 : vector<32x128xf32>
    %85 = math.exp %84 : vector<32x128xf32>
    %cst_35 = arith.constant 1.000000e+00 : f32
    %86 = vector.broadcast %cst_35 : f32 to vector<32x128xf32>
    %87 = arith.addf %86, %85 : vector<32x128xf32>
    %88 = arith.divf %86, %87 : vector<32x128xf32>
    %89 = arith.mulf %83, %88 : vector<32x128xf32>
    %cst_36 = arith.constant dense<0.000000e+00> : vector<32xf32>
    %90 = vector.multi_reduction <add>, %89, %cst_36 [1] : vector<32x128xf32> to vector<32xf32>
    %91 = vector.shape_cast %90 : vector<32xf32> to vector<32x1xf32>
    %92 = arith.mulf %89, %89 : vector<32x128xf32>
    %cst_37 = arith.constant dense<0.000000e+00> : vector<32xf32>
    %93 = vector.multi_reduction <add>, %92, %cst_37 [1] : vector<32x128xf32> to vector<32xf32>
    %94 = vector.shape_cast %93 : vector<32xf32> to vector<32x1xf32>
    %cst_38 = arith.constant 0.0416666679 : f32
    %95 = vector.broadcast %cst_38 : f32 to vector<32x1xf32>
    %96 = arith.mulf %91, %95 : vector<32x1xf32>
    %cst_39 = arith.constant 0.0416666679 : f32
    %97 = vector.broadcast %cst_39 : f32 to vector<32x1xf32>
    %98 = arith.mulf %94, %97 : vector<32x1xf32>
    %99 = arith.mulf %96, %96 : vector<32x1xf32>
    %100 = arith.subf %98, %99 : vector<32x1xf32>
    %cst_40 = arith.constant 0.000000e+00 : f32
    %101 = vector.broadcast %cst_40 : f32 to vector<32x1xf32>
    %102 = arith.maximumf %100, %101 : vector<32x1xf32>
    %103 = vector.broadcast %96 : vector<32x1xf32> to vector<32x128xf32>
    %104 = arith.subf %89, %103 : vector<32x128xf32>
    %cst_41 = arith.constant 9.99999974E-6 : f32
    %105 = vector.broadcast %cst_41 : f32 to vector<32x1xf32>
    %106 = arith.addf %102, %105 : vector<32x1xf32>
    %107 = math.rsqrt %106 : vector<32x1xf32>
    %108 = vector.broadcast %107 : vector<32x1xf32> to vector<32x128xf32>
    %109 = arith.mulf %104, %108 : vector<32x128xf32>
    %c1_42 = arith.constant 1 : index
    %c0_43 = arith.constant 0 : index
    %110 = vector.load %arg7[%c1_42, %c0_43] : memref<3x128xf32, #tpu.memory_space<vmem>>, vector<1x128xf32>
    %111 = vector.broadcast %110 : vector<1x128xf32> to vector<32x128xf32>
    %112 = arith.mulf %109, %111 : vector<32x128xf32>
    %c2_44 = arith.constant 2 : index
    %c0_45 = arith.constant 0 : index
    %113 = vector.load %arg7[%c2_44, %c0_45] : memref<3x128xf32, #tpu.memory_space<vmem>>, vector<1x128xf32>
    %114 = vector.broadcast %113 : vector<1x128xf32> to vector<32x128xf32>
    %115 = arith.addf %112, %114 : vector<32x128xf32>
    %116 = arith.truncf %115 : vector<32x128xf32> to vector<32x128xbf16>
    %c0_46 = arith.constant 0 : index
    %c0_47 = arith.constant 0 : index
    %117 = vector.load %arg8[%c0_46, %c0_47] : memref<128x128xbf16, #tpu.memory_space<vmem>>, vector<128x128xbf16>
    %cst_48 = arith.constant dense<0.000000e+00> : vector<32x128xf32>
    %118 = tpu.matmul %116, %117, %cst_48 {dimension_numbers = #tpu.dot_dimension_numbers<[1], [0], [0], [1], [0, 0, 1, 1], [], []>} : vector<32x128xbf16>, vector<128x128xbf16>, vector<32x128xf32> -> vector<32x128xf32>
    %c0_49 = arith.constant 0 : index
    %c0_50 = arith.constant 0 : index
    %119 = vector.load %arg9[%c0_49, %c0_50] : memref<3x128xf32, #tpu.memory_space<vmem>>, vector<1x128xf32>
    %120 = vector.broadcast %119 : vector<1x128xf32> to vector<32x128xf32>
    %121 = arith.addf %118, %120 : vector<32x128xf32>
    %122 = arith.negf %121 : vector<32x128xf32>
    %123 = math.exp %122 : vector<32x128xf32>
    %cst_51 = arith.constant 1.000000e+00 : f32
    %124 = vector.broadcast %cst_51 : f32 to vector<32x128xf32>
    %125 = arith.addf %124, %123 : vector<32x128xf32>
    %126 = arith.divf %124, %125 : vector<32x128xf32>
    %127 = arith.mulf %121, %126 : vector<32x128xf32>
    %cst_52 = arith.constant dense<0.000000e+00> : vector<32xf32>
    %128 = vector.multi_reduction <add>, %127, %cst_52 [1] : vector<32x128xf32> to vector<32xf32>
    %129 = vector.shape_cast %128 : vector<32xf32> to vector<32x1xf32>
    %130 = arith.mulf %127, %127 : vector<32x128xf32>
    %cst_53 = arith.constant dense<0.000000e+00> : vector<32xf32>
    %131 = vector.multi_reduction <add>, %130, %cst_53 [1] : vector<32x128xf32> to vector<32xf32>
    %132 = vector.shape_cast %131 : vector<32xf32> to vector<32x1xf32>
    %cst_54 = arith.constant 0.0416666679 : f32
    %133 = vector.broadcast %cst_54 : f32 to vector<32x1xf32>
    %134 = arith.mulf %129, %133 : vector<32x1xf32>
    %cst_55 = arith.constant 0.0416666679 : f32
    %135 = vector.broadcast %cst_55 : f32 to vector<32x1xf32>
    %136 = arith.mulf %132, %135 : vector<32x1xf32>
    %137 = arith.mulf %134, %134 : vector<32x1xf32>
    %138 = arith.subf %136, %137 : vector<32x1xf32>
    %cst_56 = arith.constant 0.000000e+00 : f32
    %139 = vector.broadcast %cst_56 : f32 to vector<32x1xf32>
    %140 = arith.maximumf %138, %139 : vector<32x1xf32>
    %141 = vector.broadcast %134 : vector<32x1xf32> to vector<32x128xf32>
    %142 = arith.subf %127, %141 : vector<32x128xf32>
    %cst_57 = arith.constant 9.99999974E-6 : f32
    %143 = vector.broadcast %cst_57 : f32 to vector<32x1xf32>
    %144 = arith.addf %140, %143 : vector<32x1xf32>
    %145 = math.rsqrt %144 : vector<32x1xf32>
    %146 = vector.broadcast %145 : vector<32x1xf32> to vector<32x128xf32>
    %147 = arith.mulf %142, %146 : vector<32x128xf32>
    %c1_58 = arith.constant 1 : index
    %c0_59 = arith.constant 0 : index
    %148 = vector.load %arg9[%c1_58, %c0_59] : memref<3x128xf32, #tpu.memory_space<vmem>>, vector<1x128xf32>
    %149 = vector.broadcast %148 : vector<1x128xf32> to vector<32x128xf32>
    %150 = arith.mulf %147, %149 : vector<32x128xf32>
    %c2_60 = arith.constant 2 : index
    %c0_61 = arith.constant 0 : index
    %151 = vector.load %arg9[%c2_60, %c0_61] : memref<3x128xf32, #tpu.memory_space<vmem>>, vector<1x128xf32>
    %152 = vector.broadcast %151 : vector<1x128xf32> to vector<32x128xf32>
    %153 = arith.addf %150, %152 : vector<32x128xf32>
    %154 = arith.addf %153, %115 : vector<32x128xf32>
    %c0_62 = arith.constant 0 : index
    %c0_63 = arith.constant 0 : index
    %155 = vector.load %arg10[%c0_62, %c0_63] : memref<32x128xf32, #tpu.memory_space<vmem>>, vector<32x128xf32>
    tpu.vector_store %arg10[%c0_62, %c0_63], %154 {strides = array<i32>} : memref<32x128xf32, #tpu.memory_space<vmem>>, vector<32x128xf32>,
    return
  }
  func.func @transform_0(%arg0: i32) -> (i32, i32) {
    %c0_i32 = arith.constant 0 : i32
    %c0_i32_0 = arith.constant 0 : i32
    return %arg0, %c0_i32 : i32, i32
  }
  func.func @transform_1(%arg0: i32) -> (i32, i32) {
    %c0_i32 = arith.constant 0 : i32
    %c0_i32_0 = arith.constant 0 : i32
    %c0_i32_1 = arith.constant 0 : i32
    return %c0_i32, %c0_i32_0 : i32, i32
  }
  func.func @transform_2(%arg0: i32) -> (i32, i32) {
    %c0_i32 = arith.constant 0 : i32
    %c0_i32_0 = arith.constant 0 : i32
    %c0_i32_1 = arith.constant 0 : i32
    return %c0_i32, %c0_i32_0 : i32, i32
  }
  func.func @transform_3(%arg0: i32) -> (i32, i32) {
    %c0_i32 = arith.constant 0 : i32
    %c0_i32_0 = arith.constant 0 : i32
    %c0_i32_1 = arith.constant 0 : i32
    return %c0_i32, %c0_i32_0 : i32, i32
  }
  func.func @transform_4(%arg0: i32) -> (i32, i32) {
    %c0_i32 = arith.constant 0 : i32
    %c0_i32_0 = arith.constant 0 : i32
    %c0_i32_1 = arith.constant 0 : i32
    return %c0_i32, %c0_i32_0 : i32, i32
  }
  func.func @transform_5(%arg0: i32) -> (i32, i32) {
    %c0_i32 = arith.constant 0 : i32
    %c0_i32_0 = arith.constant 0 : i32
    %c0_i32_1 = arith.constant 0 : i32
    return %c0_i32, %c0_i32_0 : i32, i32
  }
  func.func @transform_6(%arg0: i32) -> (i32, i32) {
    %c0_i32 = arith.constant 0 : i32
    %c0_i32_0 = arith.constant 0 : i32
    %c0_i32_1 = arith.constant 0 : i32
    return %c0_i32, %c0_i32_0 : i32, i32
  }
  func.func @transform_7(%arg0: i32) -> (i32, i32) {
    %c0_i32 = arith.constant 0 : i32
    %c0_i32_0 = arith.constant 0 : i32
    %c0_i32_1 = arith.constant 0 : i32
    return %c0_i32, %c0_i32_0 : i32, i32
  }
  func.func @transform_8(%arg0: i32) -> (i32, i32) {
    %c0_i32 = arith.constant 0 : i32
    %c0_i32_0 = arith.constant 0 : i32
    %c0_i32_1 = arith.constant 0 : i32
    return %c0_i32, %c0_i32_0 : i32, i32
  }
  func.func @transform_9(%arg0: i32) -> (i32, i32) {
    %c0_i32 = arith.constant 0 : i32
    %c0_i32_0 = arith.constant 0 : i32
    return %arg0, %c0_i32 : i32, i32
  }
}

</mosaic_0001>

<llo_original>
// kernel: tpu_custom_call.1
$region0: #{tpu_custom_call.1}
  #allocation0 [shape = 'u32[]', space=smem, size = 0x4, offset = 0x4, fixed_abs, tag = 'smem constant byte address 0x4 - core index']
  #allocation1 [shape = 'u32[144,128]{1,0:T(1,128)}', space=vmem, size = 0x12000, scoped, tag = 'internal scratch']
  %s0 = inlined_call_operand.hbm [shape: f32[32,128], index: 0, kind: input, shape index: {}]
  %s1 = inlined_call_operand.hbm [shape: bf16[128,128], index: 1, kind: input, shape index: {}]
  %s2 = inlined_call_operand.hbm [shape: f32[3,128], index: 2, kind: input, shape index: {}]
  %s3 = inlined_call_operand.hbm [shape: bf16[128,128], index: 3, kind: input, shape index: {}]
  %s4 = inlined_call_operand.vmem [shape: f32[3,128], index: 4, kind: input, shape index: {}]
  %s5 = inlined_call_operand.hbm [shape: bf16[128,128], index: 5, kind: input, shape index: {}]
  %s6 = inlined_call_operand.vmem [shape: f32[3,128], index: 6, kind: input, shape index: {}]
  %s7 = inlined_call_operand.hbm [shape: bf16[128,128], index: 7, kind: input, shape index: {}]
  %s8 = inlined_call_operand.vmem [shape: f32[3,128], index: 8, kind: input, shape index: {}]
  %s9 = inlined_call_operand.hbm [shape: f32[32,128], index: 9, kind: output, shape index: {}]
  %s10 = sld [smem:[#allocation0]]
  $region70: #{tpu_custom_call.1} parent=0
    _
  %s12 = ssub.s32 1, %s10
  %s13 = scalar_select 0, %s12, %s10
  $region1: #{tpu_custom_call.1} parent=0
    #allocation2 [shape = 'u8[16384]{0}', space=vmem, size = 0x4000, scoped, tag = 'input window, operand 0, single buffered']
    #allocation3 [shape = 's32[1]{0}', space=sflag, size = 0x4, scoped, tag = 'scoped memory for tpu_custom_call.1']
    #allocation4 [shape = 's32[1]{0}', space=sflag, size = 0x4, scoped, tag = 'scoped memory for tpu_custom_call.1']
    #allocation5 [shape = 'u8[32768]{0}', space=vmem, size = 0x8000, scoped, tag = 'input window, operand 1, single buffered']
    #allocation6 [shape = 's32[1]{0}', space=sflag, size = 0x4, scoped, tag = 'scoped memory for tpu_custom_call.1']
    #allocation7 [shape = 'u8[2048]{0}', space=vmem, size = 0x800, scoped, tag = 'input window, operand 2, single buffered']
    #allocation8 [shape = 'u8[32768]{0}', space=vmem, size = 0x8000, scoped, tag = 'input window, operand 3, single buffered']
    #allocation9 [shape = 's32[1]{0}', space=sflag, size = 0x4, scoped, tag = 'scoped memory for tpu_custom_call.1']
    #allocation10 [shape = 'u8[32768]{0}', space=vmem, size = 0x8000, scoped, tag = 'input window, operand 5, single buffered']
    #allocation11 [shape = 'u8[32768]{0}', space=vmem, size = 0x8000, scoped, tag = 'input window, operand 7, single buffered']
    #allocation12 [shape = 's32[1]{0}', space=sflag, size = 0x4, scoped, tag = 'scoped memory for tpu_custom_call.1']
    #allocation13 [shape = 'u8[16384]{0}', space=vmem, size = 0x4000, scoped, tag = 'output window, operand 0, single buffered']
    %14 = vsyncpa [#allocation3], 0
    %15 = vsyncpa [#allocation6], 0
    %16 = vsyncpa [#allocation9], 0
    %17 = vsyncpa [#allocation12], 0
    %18 = vsyncpa [#allocation4], 0
    // Predicated region
    $region2: #{tpu_custom_call.1} parent=1 // pred_check
      _
    $region3: #{tpu_custom_call.1} parent=1 // pred_check_branch
      %20 = sbr.rel (0) target = $region5
    $region4: #{tpu_custom_call.1} parent=1 // pred_region
      %s22 = ssub.s32 512, 512
      %23 = vsyncadd [#allocation3], %s22
      %s24 = sshll.u32 [#allocation2], 4
      %s25 = int_to_ptr.vmem [resolvable:$true] %s24
      %30 = dma.hbm_to_vmem [thread:$0]  %s0, 512, %s25, [#allocation3], 128, 128, 8
    $region5: #{tpu_custom_call.1} parent=1 // pred_fallthru
      _
    // Predicated region
    $region6: #{tpu_custom_call.1} parent=1 // pred_check
      _
    $region7: #{tpu_custom_call.1} parent=1 // pred_check_branch
      %32 = sbr.rel (0) target = $region9
    $region8: #{tpu_custom_call.1} parent=1 // pred_region
      %s34 = ssub.s32 1024, 1024
      %35 = vsyncadd [#allocation6], %s34
      %s36 = sshll.u32 [#allocation5], 4
      %s37 = int_to_ptr.vmem [resolvable:$true] %s36
      %42 = dma.hbm_to_vmem [thread:$0]  %s1, 1024, %s37, [#allocation6], 64, 64, 4
    $region9: #{tpu_custom_call.1} parent=1 // pred_fallthru
      _
    // Predicated region
    $region10: #{tpu_custom_call.1} parent=1 // pred_check
      _
    $region11: #{tpu_custom_call.1} parent=1 // pred_check_branch
      %44 = sbr.rel (0) target = $region13
    $region12: #{tpu_custom_call.1} parent=1 // pred_region
      %s46 = ssub.s32 64, 64
      %47 = vsyncadd [#allocation6], %s46
      %s49 = sshll.u32 [#allocation7], 4
      %s50 = int_to_ptr.vmem [resolvable:$true] %s49
      %52 = dma.hbm_to_vmem [thread:$0]  %s2, 64, %s50, [#allocation6]
    $region13: #{tpu_custom_call.1} parent=1 // pred_fallthru
      _
    // Predicated region
    $region14: #{tpu_custom_call.1} parent=1 // pred_check
      _
    $region15: #{tpu_custom_call.1} parent=1 // pred_check_branch
      %54 = sbr.rel (0) target = $region17
    $region16: #{tpu_custom_call.1} parent=1 // pred_region
      %s56 = ssub.s32 1024, 1024
      %57 = vsyncadd [#allocation9], %s56
      %s58 = sshll.u32 [#allocation8], 4
      %s59 = int_to_ptr.vmem [resolvable:$true] %s58
      %64 = dma.hbm_to_vmem [thread:$0]  %s3, 1024, %s59, [#allocation9], 64, 64, 4
    $region17: #{tpu_custom_call.1} parent=1 // pred_fallthru
      _
    // Predicated region
    $region18: #{tpu_custom_call.1} parent=1 // pred_check
      _
    $region19: #{tpu_custom_call.1} parent=1 // pred_check_branch
      %66 = sbr.rel (0) target = $region21
    $region20: #{tpu_custom_call.1} parent=1 // pred_region
      _
    $region21: #{tpu_custom_call.1} parent=1 // pred_fallthru
      _
    // Predicated region
    $region22: #{tpu_custom_call.1} parent=1 // pred_check
      _
    $region23: #{tpu_custom_call.1} parent=1 // pred_check_branch
      %68 = sbr.rel (0) target = $region25
    $region24: #{tpu_custom_call.1} parent=1 // pred_region
      %s70 = ssub.s32 1024, 1024
      %71 = vsyncadd [#allocation9], %s70
      %s72 = sshll.u32 [#allocation10], 4
      %s73 = int_to_ptr.vmem [resolvable:$true] %s72
      %78 = dma.hbm_to_vmem [thread:$0]  %s5, 1024, %s73, [#allocation9], 64, 64, 4
    $region25: #{tpu_custom_call.1} parent=1 // pred_fallthru
      _
    // Predicated region
    $region26: #{tpu_custom_call.1} parent=1 // pred_check
      _
    $region27: #{tpu_custom_call.1} parent=1 // pred_check_branch
      %80 = sbr.rel (0) target = $region29
    $region28: #{tpu_custom_call.1} parent=1 // pred_region
      _
    $region29: #{tpu_custom_call.1} parent=1 // pred_fallthru
      _
    // Predicated region
    $region30: #{tpu_custom_call.1} parent=1 // pred_check
      _
    $region31: #{tpu_custom_call.1} parent=1 // pred_check_branch
      %82 = sbr.rel (0) target = $region33
    $region32: #{tpu_custom_call.1} parent=1 // pred_region
      %s84 = ssub.s32 1024, 1024
      %85 = vsyncadd [#allocation12], %s84
      %s86 = sshll.u32 [#allocation11], 4
      %s87 = int_to_ptr.vmem [resolvable:$true] %s86
      %92 = dma.hbm_to_vmem [thread:$0]  %s7, 1024, %s87, [#allocation12], 64, 64, 4
    $region33: #{tpu_custom_call.1} parent=1 // pred_fallthru
      _
    // Predicated region
    $region34: #{tpu_custom_call.1} parent=1 // pred_check
      _
    $region35: #{tpu_custom_call.1} parent=1 // pred_check_branch
      %94 = sbr.rel (0) target = $region37
    $region36: #{tpu_custom_call.1} parent=1 // pred_region
      _
    $region37: #{tpu_custom_call.1} parent=1 // pred_fallthru
      _
    // Predicated region
    $region38: #{tpu_custom_call.1} parent=1 // pred_check
      _
    $region39: #{tpu_custom_call.1} parent=1 // pred_check_branch
      %96 = sbr.rel (0) target = $region41
    $region40: #{tpu_custom_call.1} parent=1 // pred_region
      %97 = dma.done [#allocation3], 512
    $region41: #{tpu_custom_call.1} parent=1 // pred_fallthru
      _
    // Predicated region
    $region42: #{tpu_custom_call.1} parent=1 // pred_check
      _
    $region43: #{tpu_custom_call.1} parent=1 // pred_check_branch
      %99 = sbr.rel (0) target = $region45
    $region44: #{tpu_custom_call.1} parent=1 // pred_region
      %100 = dma.done [#allocation6], 1024
    $region45: #{tpu_custom_call.1} parent=1 // pred_fallthru
      _
    // Predicated region
    $region46: #{tpu_custom_call.1} parent=1 // pred_check
      _
    $region47: #{tpu_custom_call.1} parent=1 // pred_check_branch
      %102 = sbr.rel (0) target = $region49
    $region48: #{tpu_custom_call.1} parent=1 // pred_region
      %103 = dma.done [#allocation6], 64
    $region49: #{tpu_custom_call.1} parent=1 // pred_fallthru
      _
    // Predicated region
    $region50: #{tpu_custom_call.1} parent=1 // pred_check
      _
    $region51: #{tpu_custom_call.1} parent=1 // pred_check_branch
      %105 = sbr.rel (0) target = $region53
    $region52: #{tpu_custom_call.1} parent=1 // pred_region
      %106 = dma.done [#allocation9], 1024
    $region53: #{tpu_custom_call.1} parent=1 // pred_fallthru
      _
    // Predicated region
    $region54: #{tpu_custom_call.1} parent=1 // pred_check
      _
    $region55: #{tpu_custom_call.1} parent=1 // pred_check_branch
      %108 = sbr.rel (0) target = $region57
    $region56: #{tpu_custom_call.1} parent=1 // pred_region
      %109 = dma.done [#allocation9], 1024
    $region57: #{tpu_custom_call.1} parent=1 // pred_fallthru
      _
    // Predicated region
    $region58: #{tpu_custom_call.1} parent=1 // pred_check
      _
    $region59: #{tpu_custom_call.1} parent=1 // pred_check_branch
      %111 = sbr.rel (0) target = $region61
    $region60: #{tpu_custom_call.1} parent=1 // pred_region
      %112 = dma.done [#allocation12], 1024
    $region61: #{tpu_custom_call.1} parent=1 // pred_fallthru
      _
    %v114 = vld [vmem:[#allocation2] sm:$0xff]
    %v115 = vld [vmem:[#allocation2 + $0x8] sm:$0xff]
    %v116 = vld [vmem:[#allocation2 + $0x10] sm:$0xff]
    %v117 = vld [vmem:[#allocation2 + $0x18] sm:$0xff]
    %v118 = vpack.c.bf16 %v115, %v114
    %v119 = vpack.c.bf16 %v117, %v116
    %v120 = vld [vmem:[#allocation5] sm:$0xf]
    %v121 = vld [vmem:[#allocation5 + $0x4] sm:$0xf]
    %v122 = vld [vmem:[#allocation5 + $0x8] sm:$0xf]
    %v123 = vld [vmem:[#allocation5 + $0xc] sm:$0xf]
    %v124 = vld [vmem:[#allocation5 + $0x10] sm:$0xf]
    %v125 = vld [vmem:[#allocation5 + $0x14] sm:$0xf]
    %v126 = vld [vmem:[#allocation5 + $0x18] sm:$0xf]
    %v127 = vld [vmem:[#allocation5 + $0x1c] sm:$0xf]
    %v128 = vld [vmem:[#allocation5 + $0x20] sm:$0xf]
    %v129 = vld [vmem:[#allocation5 + $0x24] sm:$0xf]
    %v130 = vld [vmem:[#allocation5 + $0x28] sm:$0xf]
    %v131 = vld [vmem:[#allocation5 + $0x2c] sm:$0xf]
    %v132 = vld [vmem:[#allocation5 + $0x30] sm:$0xf]
    %v133 = vld [vmem:[#allocation5 + $0x34] sm:$0xf]
    %v134 = vld [vmem:[#allocation5 + $0x38] sm:$0xf]
    %v135 = vld [vmem:[#allocation5 + $0x3c] sm:$0xf]
    %v136 = vld [vmem:[#allocation7] sm:$0x1]
    %v137 = vlaneseq
    %v138 = vshrl.u32 %v137, 7
    %v139 = vsub.s32 0, %v138
    %v140 = vrot.slane %v136, %v139
    %v157 = vunpack.c.l.b16 %v120
    %v158 = vunpack.c.l.b16 %v121
    %v159 = vunpack.c.l.b16 %v122
    %v160 = vunpack.c.l.b16 %v123
    %v161 = vunpack.c.l.b16 %v124
    %v162 = vunpack.c.l.b16 %v125
    %v163 = vunpack.c.l.b16 %v126
    %v164 = vunpack.c.l.b16 %v127
    %v165 = vunpack.c.l.b16 %v128
    %v166 = vunpack.c.l.b16 %v129
    %v167 = vunpack.c.l.b16 %v130
    %v168 = vunpack.c.l.b16 %v131
    %v169 = vunpack.c.l.b16 %v132
    %v170 = vunpack.c.l.b16 %v133
    %v171 = vunpack.c.l.b16 %v134
    %v172 = vunpack.c.l.b16 %v135
    %v173 = vpack.c.b16 %v158, %v157
    %v174 = vpack.c.b16 %v160, %v159
    %v175 = vpack.c.b16 %v162, %v161
    %v176 = vpack.c.b16 %v164, %v163
    %v177 = vpack.c.b16 %v166, %v165
    %v178 = vpack.c.b16 %v168, %v167
    %v179 = vpack.c.b16 %v170, %v169
    %v180 = vpack.c.b16 %v172, %v171
    %189 = vmatprep.subr.bf16.mxu0 0
    %190 = vmatpush1.bf16.msra.mxu0 %v180
    %191 = vmatprep.subr.bf16.mxu0 0
    %192 = vmatpush1.bf16.msra.mxu0 %v179
    %193 = vmatprep.subr.bf16.mxu0 0
    %194 = vmatpush1.bf16.msra.mxu0 %v178
    %195 = vmatprep.subr.bf16.mxu0 0
    %196 = vmatpush1.bf16.msra.mxu0 %v177
    %197 = vmatprep.subr.bf16.mxu0 0
    %198 = vmatpush1.bf16.msra.mxu0 %v176
    %199 = vmatprep.subr.bf16.mxu0 0
    %200 = vmatpush1.bf16.msra.mxu0 %v175
    %201 = vmatprep.subr.bf16.mxu0 0
    %202 = vmatpush1.bf16.msra.mxu0 %v174
    %203 = vmatprep.subr.bf16.mxu0 0
    %204 = vmatpush1.bf16.msra.mxu0 %v173
    %205 = vmatprep.subr.bf16.mxu0 0
    %206 = vmatpush2.bf16.msra.mxu0 0
    %207 = vmatprep.subr.bf16.mxu0 0
    %208 = vmatpush2.bf16.msra.mxu0 0
    %209 = vmatprep.subr.bf16.mxu0 0
    %210 = vmatpush2.bf16.msra.mxu0 0
    %211 = vmatprep.subr.bf16.mxu0 0
    %212 = vmatpush2.bf16.msra.mxu0 0
    %213 = vmatprep.subr.bf16.mxu0 0
    %214 = vmatpush2.bf16.msra.mxu0 0
    %215 = vmatprep.subr.bf16.mxu0 0
    %216 = vmatpush2.bf16.msra.mxu0 0
    %217 = vmatprep.subr.bf16.mxu0 0
    %218 = vmatpush2.bf16.msra.mxu0 0
    %219 = vmatprep.subr.bf16.mxu0 0
    %220 = vmatpush2.bf16.msra.mxu0 0
    %221 = vmatprep.mubr.bf16.mxu0 0
    %222 = vmatmul.mubr.bf16.gmra.mxu0 %v118
    %v223 = vpop.f32.mrf.mxu0
    %v224 = vadd.f32 %v140, %v223
    %v225 = vpop.f32.mrf.mxu0
    %v226 = vpop.f32.mrf.mxu0
    %v227 = vadd.f32 %v140, %v226
    %v228 = vpop.f32.mrf.mxu0
    %229 = vmatprep.mubr.bf16.mxu0 0
    %230 = vmatmul.mubr.bf16.gmra.mxu0 %v119
    %v231 = vpop.f32.mrf.mxu0
    %v232 = vadd.f32 %v140, %v231
    %v233 = vpop.f32.mrf.mxu0
    %v234 = vpop.f32.mrf.mxu0
    %v235 = vadd.f32 %v140, %v234
    %v236 = vpop.f32.mrf.mxu0
    %237 = vdwg.mxu0
    %v238 = vxor.u32 %v224, 2147483648
    %v239 = vxor.u32 %v227, 2147483648
    %v240 = vxor.u32 %v232, 2147483648
    %v241 = vxor.u32 %v235, 2147483648
    %v242 = vmul.f32 %v238, 1.442695
    %v243 = vpow.pop %v242
    %v244 = vmul.f32 %v239, 1.442695
    %v245 = vpow.pop %v244
    %v246 = vmul.f32 %v240, 1.442695
    %v247 = vpow.pop %v246
    %v248 = vmul.f32 %v241, 1.442695
    %v249 = vpow.pop %v248
    %v250 = vadd.f32 %v243, 1.0
    %v251 = vadd.f32 %v245, 1.0
    %v252 = vadd.f32 %v247, 1.0
    %v253 = vadd.f32 %v249, 1.0
    %v254 = vrcp.pop %v250
    %v255 = vmul.f32 1.0, %v254
    %v256 = vrcp.pop %v251
    %v257 = vmul.f32 1.0, %v256
    %v258 = vrcp.pop %v252
    %v259 = vmul.f32 1.0, %v258
    %v260 = vrcp.pop %v253
    %v261 = vmul.f32 1.0, %v260
    %v262 = vmul.f32 %v224, %v255
    %v263 = vmul.f32 %v227, %v257
    %v264 = vmul.f32 %v232, %v259
    %v265 = vmul.f32 %v235, %v261
    %266 = vadd.xlane.f32.xlu0 %v262
    %v267 = vpop.xlane.xlu0 %266
    %268 = vadd.xlane.f32.xlu0 %v263
    %v269 = vpop.xlane.xlu0 %268
    %270 = vadd.xlane.f32.xlu0 %v264
    %v271 = vpop.xlane.xlu0 %270
    %272 = vadd.xlane.f32.xlu0 %v265
    %v273 = vpop.xlane.xlu0 %272
    %v274 = vmul.f32 %v262, %v262
    %v275 = vmul.f32 %v263, %v263
    %v276 = vmul.f32 %v264, %v264
    %v277 = vmul.f32 %v265, %v265
    %278 = vadd.xlane.f32.xlu0 %v274
    %v279 = vpop.xlane.xlu0 %278
    %280 = vadd.xlane.f32.xlu0 %v275
    %v281 = vpop.xlane.xlu0 %280
    %282 = vadd.xlane.f32.xlu0 %v276
    %v283 = vpop.xlane.xlu0 %282
    %284 = vadd.xlane.f32.xlu0 %v277
    %v285 = vpop.xlane.xlu0 %284
    %v286 = vmul.f32 %v267, 0.020833334
    %v287 = vmul.f32 %v269, 0.020833334
    %v288 = vmul.f32 %v271, 0.020833334
    %v289 = vmul.f32 %v273, 0.020833334
    %v290 = vmul.f32 %v279, 0.020833334
    %v291 = vmul.f32 %v281, 0.020833334
    %v292 = vmul.f32 %v283, 0.020833334
    %v293 = vmul.f32 %v285, 0.020833334
    %v294 = vmul.f32 %v286, %v286
    %v295 = vmul.f32 %v287, %v287
    %v296 = vmul.f32 %v288, %v288
    %v297 = vmul.f32 %v289, %v289
    %v298 = vsub.f32 %v290, %v294
    %v299 = vsub.f32 %v291, %v295
    %v300 = vsub.f32 %v292, %v296
    %v301 = vsub.f32 %v293, %v297
    %v302 = vmax.f32 %v298, 0.0
    %v303 = vmax.f32 %v299, 0.0
    %v304 = vmax.f32 %v300, 0.0
    %v305 = vmax.f32 %v301, 0.0
    %v306 = vsub.f32 %v262, %v286
    %v307 = vsub.f32 %v263, %v287
    %v308 = vsub.f32 %v264, %v288
    %v309 = vsub.f32 %v265, %v289
    %v310 = vadd.f32 %v302, 1e-05
    %v311 = vadd.f32 %v303, 1e-05
    %v312 = vadd.f32 %v304, 1e-05
    %v313 = vadd.f32 %v305, 1e-05
    %v314 = vrsqrt.pop %v310
    %v315 = vrsqrt.pop %v311
    %v316 = vrsqrt.pop %v312
    %v317 = vrsqrt.pop %v313
    %v318 = vmul.f32 %v306, %v314
    %v319 = vmul.f32 %v307, %v315
    %v320 = vmul.f32 %v308, %v316
    %v321 = vmul.f32 %v309, %v317
    %v322 = vld [vmem:[#allocation7 + $0x1] sm:$0x1]
    %v323 = vlaneseq
    %v324 = vshrl.u32 %v323, 7
    %v325 = vsub.s32 0, %v324
    %v326 = vrot.slane %v322, %v325
    %v327 = vmul.f32 %v318, %v326
    %v328 = vmul.f32 %v319, %v326
    %v329 = vmul.f32 %v320, %v326
    %v330 = vmul.f32 %v321, %v326
    %v331 = vld [vmem:[#allocation7 + $0x2] sm:$0x1]
    %v332 = vlaneseq
    %v333 = vshrl.u32 %v332, 7
    %v334 = vsub.s32 0, %v333
    %v335 = vrot.slane %v331, %v334
    %v336 = vadd.f32 %v327, %v335
    %v337 = vadd.f32 %v328, %v335
    %v338 = vadd.f32 %v329, %v335
    %v339 = vadd.f32 %v330, %v335
    %v340 = vpack.c.bf16 %v337, %v336
    %v341 = vpack.c.bf16 %v339, %v338
    %v342 = vld [vmem:[#allocation8] sm:$0xf]
    %v343 = vld [vmem:[#allocation8 + $0x4] sm:$0xf]
    %v344 = vld [vmem:[#allocation8 + $0x8] sm:$0xf]
    %v345 = vld [vmem:[#allocation8 + $0xc] sm:$0xf]
    %v346 = vld [vmem:[#allocation8 + $0x10] sm:$0xf]
    %v347 = vld [vmem:[#allocation8 + $0x14] sm:$0xf]
    %v348 = vld [vmem:[#allocation8 + $0x18] sm:$0xf]
    %v349 = vld [vmem:[#allocation8 + $0x1c] sm:$0xf]
    %v350 = vld [vmem:[#allocation8 + $0x20] sm:$0xf]
    %v351 = vld [vmem:[#allocation8 + $0x24] sm:$0xf]
    %v352 = vld [vmem:[#allocation8 + $0x28] sm:$0xf]
    %v353 = vld [vmem:[#allocation8 + $0x2c] sm:$0xf]
    %v354 = vld [vmem:[#allocation8 + $0x30] sm:$0xf]
    %v355 = vld [vmem:[#allocation8 + $0x34] sm:$0xf]
    %v356 = vld [vmem:[#allocation8 + $0x38] sm:$0xf]
    %v357 = vld [vmem:[#allocation8 + $0x3c] sm:$0xf]
    %v358 = vld [vmem:[%s4] sm:$0x1]
    %v359 = vlaneseq
    %v360 = vshrl.u32 %v359, 7
    %v361 = vsub.s32 0, %v360
    %v362 = vrot.slane %v358, %v361
    %v379 = vunpack.c.l.b16 %v342
    %v380 = vunpack.c.l.b16 %v343
    %v381 = vunpack.c.l.b16 %v344
    %v382 = vunpack.c.l.b16 %v345
    %v383 = vunpack.c.l.b16 %v346
    %v384 = vunpack.c.l.b16 %v347
    %v385 = vunpack.c.l.b16 %v348
    %v386 = vunpack.c.l.b16 %v349
    %v387 = vunpack.c.l.b16 %v350
    %v388 = vunpack.c.l.b16 %v351
    %v389 = vunpack.c.l.b16 %v352
    %v390 = vunpack.c.l.b16 %v353
    %v391 = vunpack.c.l.b16 %v354
    %v392 = vunpack.c.l.b16 %v355
    %v393 = vunpack.c.l.b16 %v356
    %v394 = vunpack.c.l.b16 %v357
    %v395 = vpack.c.b16 %v380, %v379
    %v396 = vpack.c.b16 %v382, %v381
    %v397 = vpack.c.b16 %v384, %v383
    %v398 = vpack.c.b16 %v386, %v385
    %v399 = vpack.c.b16 %v388, %v387
    %v400 = vpack.c.b16 %v390, %v389
    %v401 = vpack.c.b16 %v392, %v391
    %v402 = vpack.c.b16 %v394, %v393
    %411 = vmatprep.subr.bf16.mxu0 0
    %412 = vmatpush1.bf16.msra.mxu0 %v402
    %413 = vmatprep.subr.bf16.mxu0 0
    %414 = vmatpush1.bf16.msra.mxu0 %v401
    %415 = vmatprep.subr.bf16.mxu0 0
    %416 = vmatpush1.bf16.msra.mxu0 %v400
    %417 = vmatprep.subr.bf16.mxu0 0
    %418 = vmatpush1.bf16.msra.mxu0 %v399
    %419 = vmatprep.subr.bf16.mxu0 0
    %420 = vmatpush1.bf16.msra.mxu0 %v398
    %421 = vmatprep.subr.bf16.mxu0 0
    %422 = vmatpush1.bf16.msra.mxu0 %v397
    %423 = vmatprep.subr.bf16.mxu0 0
    %424 = vmatpush1.bf16.msra.mxu0 %v396
    %425 = vmatprep.subr.bf16.mxu0 0
    %426 = vmatpush1.bf16.msra.mxu0 %v395
    %427 = vmatprep.subr.bf16.mxu0 0
    %428 = vmatpush2.bf16.msra.mxu0 0
    %429 = vmatprep.subr.bf16.mxu0 0
    %430 = vmatpush2.bf16.msra.mxu0 0
    %431 = vmatprep.subr.bf16.mxu0 0
    %432 = vmatpush2.bf16.msra.mxu0 0
    %433 = vmatprep.subr.bf16.mxu0 0
    %434 = vmatpush2.bf16.msra.mxu0 0
    %435 = vmatprep.subr.bf16.mxu0 0
    %436 = vmatpush2.bf16.msra.mxu0 0
    %437 = vmatprep.subr.bf16.mxu0 0
    %438 = vmatpush2.bf16.msra.mxu0 0
    %439 = vmatprep.subr.bf16.mxu0 0
    %440 = vmatpush2.bf16.msra.mxu0 0
    %441 = vmatprep.subr.bf16.mxu0 0
    %442 = vmatpush2.bf16.msra.mxu0 0
    %443 = vmatprep.mubr.bf16.mxu0 0
    %444 = vmatmul.mubr.bf16.gmra.mxu0 %v340
    %v445 = vpop.f32.mrf.mxu0
    %v446 = vadd.f32 %v362, %v445
    %v447 = vpop.f32.mrf.mxu0
    %v448 = vpop.f32.mrf.mxu0
    %v449 = vadd.f32 %v362, %v448
    %v450 = vpop.f32.mrf.mxu0
    %451 = vmatprep.mubr.bf16.mxu0 0
    %452 = vmatmul.mubr.bf16.gmra.mxu0 %v341
    %v453 = vpop.f32.mrf.mxu0
    %v454 = vadd.f32 %v362, %v453
    %v455 = vpop.f32.mrf.mxu0
    %v456 = vpop.f32.mrf.mxu0
    %v457 = vadd.f32 %v362, %v456
    %v458 = vpop.f32.mrf.mxu0
    %459 = vdwg.mxu0
    %v460 = vxor.u32 %v446, 2147483648
    %v461 = vxor.u32 %v449, 2147483648
    %v462 = vxor.u32 %v454, 2147483648
    %v463 = vxor.u32 %v457, 2147483648
    %v464 = vmul.f32 %v460, 1.442695
    %v465 = vpow.pop %v464
    %v466 = vmul.f32 %v461, 1.442695
    %v467 = vpow.pop %v466
    %v468 = vmul.f32 %v462, 1.442695
    %v469 = vpow.pop %v468
    %v470 = vmul.f32 %v463, 1.442695
    %v471 = vpow.pop %v470
    %v472 = vadd.f32 %v465, 1.0
    %v473 = vadd.f32 %v467, 1.0
    %v474 = vadd.f32 %v469, 1.0
    %v475 = vadd.f32 %v471, 1.0
    %v476 = vrcp.pop %v472
    %v477 = vmul.f32 1.0, %v476
    %v478 = vrcp.pop %v473
    %v479 = vmul.f32 1.0, %v478
    %v480 = vrcp.pop %v474
    %v481 = vmul.f32 1.0, %v480
    %v482 = vrcp.pop %v475
    %v483 = vmul.f32 1.0, %v482
    %v484 = vmul.f32 %v446, %v477
    %v485 = vmul.f32 %v449, %v479
    %v486 = vmul.f32 %v454, %v481
    %v487 = vmul.f32 %v457, %v483
    %488 = vadd.xlane.f32.xlu0 %v484
    %v489 = vpop.xlane.xlu0 %488
    %490 = vadd.xlane.f32.xlu0 %v485
    %v491 = vpop.xlane.xlu0 %490
    %492 = vadd.xlane.f32.xlu0 %v486
    %v493 = vpop.xlane.xlu0 %492
    %494 = vadd.xlane.f32.xlu0 %v487
    %v495 = vpop.xlane.xlu0 %494
    %v496 = vmul.f32 %v484, %v484
    %v497 = vmul.f32 %v485, %v485
    %v498 = vmul.f32 %v486, %v486
    %v499 = vmul.f32 %v487, %v487
    %500 = vadd.xlane.f32.xlu0 %v496
    %v501 = vpop.xlane.xlu0 %500
    %502 = vadd.xlane.f32.xlu0 %v497
    %v503 = vpop.xlane.xlu0 %502
    %504 = vadd.xlane.f32.xlu0 %v498
    %v505 = vpop.xlane.xlu0 %504
    %506 = vadd.xlane.f32.xlu0 %v499
    %v507 = vpop.xlane.xlu0 %506
    %v508 = vmul.f32 %v489, 0.020833334
    %v509 = vmul.f32 %v491, 0.020833334
    %v510 = vmul.f32 %v493, 0.020833334
    %v511 = vmul.f32 %v495, 0.020833334
    %v512 = vmul.f32 %v501, 0.020833334
    %v513 = vmul.f32 %v503, 0.020833334
    %v514 = vmul.f32 %v505, 0.020833334
    %v515 = vmul.f32 %v507, 0.020833334
    %v516 = vmul.f32 %v508, %v508
    %v517 = vmul.f32 %v509, %v509
    %v518 = vmul.f32 %v510, %v510
    %v519 = vmul.f32 %v511, %v511
    %v520 = vsub.f32 %v512, %v516
    %v521 = vsub.f32 %v513, %v517
    %v522 = vsub.f32 %v514, %v518
    %v523 = vsub.f32 %v515, %v519
    %v524 = vmax.f32 %v520, 0.0
    %v525 = vmax.f32 %v521, 0.0
    %v526 = vmax.f32 %v522, 0.0
    %v527 = vmax.f32 %v523, 0.0
    %v528 = vsub.f32 %v484, %v508
    %v529 = vsub.f32 %v485, %v509
    %v530 = vsub.f32 %v486, %v510
    %v531 = vsub.f32 %v487, %v511
    %v532 = vadd.f32 %v524, 1e-05
    %v533 = vadd.f32 %v525, 1e-05
    %v534 = vadd.f32 %v526, 1e-05
    %v535 = vadd.f32 %v527, 1e-05
    %v536 = vrsqrt.pop %v532
    %v537 = vrsqrt.pop %v533
    %v538 = vrsqrt.pop %v534
    %v539 = vrsqrt.pop %v535
    %v540 = vmul.f32 %v528, %v536
    %v541 = vmul.f32 %v529, %v537
    %v542 = vmul.f32 %v530, %v538
    %v543 = vmul.f32 %v531, %v539
    %v544 = vld [vmem:[%s4 + $0x1] sm:$0x1]
    %v545 = vlaneseq
    %v546 = vshrl.u32 %v545, 7
    %v547 = vsub.s32 0, %v546
    %v548 = vrot.slane %v544, %v547
    %v549 = vmul.f32 %v540, %v548
    %v550 = vmul.f32 %v541, %v548
    %v551 = vmul.f32 %v542, %v548
    %v552 = vmul.f32 %v543, %v548
    %v553 = vld [vmem:[%s4 + $0x2] sm:$0x1]
    %v554 = vlaneseq
    %v555 = vshrl.u32 %v554, 7
    %v556 = vsub.s32 0, %v555
    %v557 = vrot.slane %v553, %v556
    %v558 = vadd.f32 %v549, %v557
    %v559 = vadd.f32 %v550, %v557
    %v560 = vadd.f32 %v551, %v557
    %v561 = vadd.f32 %v552, %v557
    %v562 = vadd.f32 %v558, %v336
    %v563 = vadd.f32 %v559, %v337
    %v564 = vadd.f32 %v560, %v338
    %v565 = vadd.f32 %v561, %v339
    %v566 = vpack.c.bf16 %v563, %v562
    %v567 = vpack.c.bf16 %v565, %v564
    %v568 = vld [vmem:[#allocation10] sm:$0xf]
    %v569 = vld [vmem:[#allocation10 + $0x4] sm:$0xf]
    %v570 = vld [vmem:[#allocation10 + $0x8] sm:$0xf]
    %v571 = vld [vmem:[#allocation10 + $0xc] sm:$0xf]
    %v572 = vld [vmem:[#allocation10 + $0x10] sm:$0xf]
    %v573 = vld [vmem:[#allocation10 + $0x14] sm:$0xf]
    %v574 = vld [vmem:[#allocation10 + $0x18] sm:$0xf]
    %v575 = vld [vmem:[#allocation10 + $0x1c] sm:$0xf]
    %v576 = vld [vmem:[#allocation10 + $0x20] sm:$0xf]
    %v577 = vld [vmem:[#allocation10 + $0x24] sm:$0xf]
    %v578 = vld [vmem:[#allocation10 + $0x28] sm:$0xf]
    %v579 = vld [vmem:[#allocation10 + $0x2c] sm:$0xf]
    %v580 = vld [vmem:[#allocation10 + $0x30] sm:$0xf]
    %v581 = vld [vmem:[#allocation10 + $0x34] sm:$0xf]
    %v582 = vld [vmem:[#allocation10 + $0x38] sm:$0xf]
    %v583 = vld [vmem:[#allocation10 + $0x3c] sm:$0xf]
    %v584 = vld [vmem:[%s6] sm:$0x1]
    %v585 = vlaneseq
    %v586 = vshrl.u32 %v585, 7
    %v587 = vsub.s32 0, %v586
    %v588 = vrot.slane %v584, %v587
    %v605 = vunpack.c.l.b16 %v568
    %v606 = vunpack.c.l.b16 %v569
    %v607 = vunpack.c.l.b16 %v570
    %v608 = vunpack.c.l.b16 %v571
    %v609 = vunpack.c.l.b16 %v572
    %v610 = vunpack.c.l.b16 %v573
    %v611 = vunpack.c.l.b16 %v574
    %v612 = vunpack.c.l.b16 %v575
    %v613 = vunpack.c.l.b16 %v576
    %v614 = vunpack.c.l.b16 %v577
    %v615 = vunpack.c.l.b16 %v578
    %v616 = vunpack.c.l.b16 %v579
    %v617 = vunpack.c.l.b16 %v580
    %v618 = vunpack.c.l.b16 %v581
    %v619 = vunpack.c.l.b16 %v582
    %v620 = vunpack.c.l.b16 %v583
    %v621 = vpack.c.b16 %v606, %v605
    %v622 = vpack.c.b16 %v608, %v607
    %v623 = vpack.c.b16 %v610, %v609
    %v624 = vpack.c.b16 %v612, %v611
    %v625 = vpack.c.b16 %v614, %v613
    %v626 = vpack.c.b16 %v616, %v615
    %v627 = vpack.c.b16 %v618, %v617
    %v628 = vpack.c.b16 %v620, %v619
    %637 = vmatprep.subr.bf16.mxu0 0
    %638 = vmatpush1.bf16.msra.mxu0 %v628
    %639 = vmatprep.subr.bf16.mxu0 0
    %640 = vmatpush1.bf16.msra.mxu0 %v627
    %641 = vmatprep.subr.bf16.mxu0 0
    %642 = vmatpush1.bf16.msra.mxu0 %v626
    %643 = vmatprep.subr.bf16.mxu0 0
    %644 = vmatpush1.bf16.msra.mxu0 %v625
    %645 = vmatprep.subr.bf16.mxu0 0
    %646 = vmatpush1.bf16.msra.mxu0 %v624
    %647 = vmatprep.subr.bf16.mxu0 0
    %648 = vmatpush1.bf16.msra.mxu0 %v623
    %649 = vmatprep.subr.bf16.mxu0 0
    %650 = vmatpush1.bf16.msra.mxu0 %v622
    %651 = vmatprep.subr.bf16.mxu0 0
    %652 = vmatpush1.bf16.msra.mxu0 %v621
    %653 = vmatprep.subr.bf16.mxu0 0
    %654 = vmatpush2.bf16.msra.mxu0 0
    %655 = vmatprep.subr.bf16.mxu0 0
    %656 = vmatpush2.bf16.msra.mxu0 0
    %657 = vmatprep.subr.bf16.mxu0 0
    %658 = vmatpush2.bf16.msra.mxu0 0
    %659 = vmatprep.subr.bf16.mxu0 0
    %660 = vmatpush2.bf16.msra.mxu0 0
    %661 = vmatprep.subr.bf16.mxu0 0
    %662 = vmatpush2.bf16.msra.mxu0 0
    %663 = vmatprep.subr.bf16.mxu0 0
    %664 = vmatpush2.bf16.msra.mxu0 0
    %665 = vmatprep.subr.bf16.mxu0 0
    %666 = vmatpush2.bf16.msra.mxu0 0
    %667 = vmatprep.subr.bf16.mxu0 0
    %668 = vmatpush2.bf16.msra.mxu0 0
    %669 = vmatprep.mubr.bf16.mxu0 0
    %670 = vmatmul.mubr.bf16.gmra.mxu0 %v566
    %v671 = vpop.f32.mrf.mxu0
    %v672 = vadd.f32 %v588, %v671
    %v673 = vpop.f32.mrf.mxu0
    %v674 = vpop.f32.mrf.mxu0
    %v675 = vadd.f32 %v588, %v674
    %v676 = vpop.f32.mrf.mxu0
    %677 = vmatprep.mubr.bf16.mxu0 0
    %678 = vmatmul.mubr.bf16.gmra.mxu0 %v567
    %v679 = vpop.f32.mrf.mxu0
    %v680 = vadd.f32 %v588, %v679
    %v681 = vpop.f32.mrf.mxu0
    %v682 = vpop.f32.mrf.mxu0
    %v683 = vadd.f32 %v588, %v682
    %v684 = vpop.f32.mrf.mxu0
    %685 = vdwg.mxu0
    %v686 = vxor.u32 %v672, 2147483648
    %v687 = vxor.u32 %v675, 2147483648
    %v688 = vxor.u32 %v680, 2147483648
    %v689 = vxor.u32 %v683, 2147483648
    %v690 = vmul.f32 %v686, 1.442695
    %v691 = vpow.pop %v690
    %v692 = vmul.f32 %v687, 1.442695
    %v693 = vpow.pop %v692
    %v694 = vmul.f32 %v688, 1.442695
    %v695 = vpow.pop %v694
    %v696 = vmul.f32 %v689, 1.442695
    %v697 = vpow.pop %v696
    %v698 = vadd.f32 %v691, 1.0
    %v699 = vadd.f32 %v693, 1.0
    %v700 = vadd.f32 %v695, 1.0
    %v701 = vadd.f32 %v697, 1.0
    %v702 = vrcp.pop %v698
    %v703 = vmul.f32 1.0, %v702
    %v704 = vrcp.pop %v699
    %v705 = vmul.f32 1.0, %v704
    %v706 = vrcp.pop %v700
    %v707 = vmul.f32 1.0, %v706
    %v708 = vrcp.pop %v701
    %v709 = vmul.f32 1.0, %v708
    %v710 = vmul.f32 %v672, %v703
    %v711 = vmul.f32 %v675, %v705
    %v712 = vmul.f32 %v680, %v707
    %v713 = vmul.f32 %v683, %v709
    %714 = vadd.xlane.f32.xlu0 %v710
    %v715 = vpop.xlane.xlu0 %714
    %716 = vadd.xlane.f32.xlu0 %v711
    %v717 = vpop.xlane.xlu0 %716
    %718 = vadd.xlane.f32.xlu0 %v712
    %v719 = vpop.xlane.xlu0 %718
    %720 = vadd.xlane.f32.xlu0 %v713
    %v721 = vpop.xlane.xlu0 %720
    %v722 = vmul.f32 %v710, %v710
    %v723 = vmul.f32 %v711, %v711
    %v724 = vmul.f32 %v712, %v712
    %v725 = vmul.f32 %v713, %v713
    %726 = vadd.xlane.f32.xlu0 %v722
    %v727 = vpop.xlane.xlu0 %726
    %728 = vadd.xlane.f32.xlu0 %v723
    %v729 = vpop.xlane.xlu0 %728
    %730 = vadd.xlane.f32.xlu0 %v724
    %v731 = vpop.xlane.xlu0 %730
    %732 = vadd.xlane.f32.xlu0 %v725
    %v733 = vpop.xlane.xlu0 %732
    %v734 = vmul.f32 %v715, 0.041666668
    %v735 = vmul.f32 %v717, 0.041666668
    %v736 = vmul.f32 %v719, 0.041666668
    %v737 = vmul.f32 %v721, 0.041666668
    %v738 = vmul.f32 %v727, 0.041666668
    %v739 = vmul.f32 %v729, 0.041666668
    %v740 = vmul.f32 %v731, 0.041666668
    %v741 = vmul.f32 %v733, 0.041666668
    %v742 = vmul.f32 %v734, %v734
    %v743 = vmul.f32 %v735, %v735
    %v744 = vmul.f32 %v736, %v736
    %v745 = vmul.f32 %v737, %v737
    %v746 = vsub.f32 %v738, %v742
    %v747 = vsub.f32 %v739, %v743
    %v748 = vsub.f32 %v740, %v744
    %v749 = vsub.f32 %v741, %v745
    %v750 = vmax.f32 %v746, 0.0
    %v751 = vmax.f32 %v747, 0.0
    %v752 = vmax.f32 %v748, 0.0
    %v753 = vmax.f32 %v749, 0.0
    %v754 = vsub.f32 %v710, %v734
    %v755 = vsub.f32 %v711, %v735
    %v756 = vsub.f32 %v712, %v736
    %v757 = vsub.f32 %v713, %v737
    %v758 = vadd.f32 %v750, 1e-05
    %v759 = vadd.f32 %v751, 1e-05
    %v760 = vadd.f32 %v752, 1e-05
    %v761 = vadd.f32 %v753, 1e-05
    %v762 = vrsqrt.pop %v758
    %v763 = vrsqrt.pop %v759
    %v764 = vrsqrt.pop %v760
    %v765 = vrsqrt.pop %v761
    %v766 = vmul.f32 %v754, %v762
    %v767 = vmul.f32 %v755, %v763
    %v768 = vmul.f32 %v756, %v764
    %v769 = vmul.f32 %v757, %v765
    %v770 = vld [vmem:[%s6 + $0x1] sm:$0x1]
    %v771 = vlaneseq
    %v772 = vshrl.u32 %v771, 7
    %v773 = vsub.s32 0, %v772
    %v774 = vrot.slane %v770, %v773
    %v775 = vmul.f32 %v766, %v774
    %v776 = vmul.f32 %v767, %v774
    %v777 = vmul.f32 %v768, %v774
    %v778 = vmul.f32 %v769, %v774
    %v779 = vld [vmem:[%s6 + $0x2] sm:$0x1]
    %v780 = vlaneseq
    %v781 = vshrl.u32 %v780, 7
    %v782 = vsub.s32 0, %v781
    %v783 = vrot.slane %v779, %v782
    %v784 = vadd.f32 %v775, %v783
    %v785 = vadd.f32 %v776, %v783
    %v786 = vadd.f32 %v777, %v783
    %v787 = vadd.f32 %v778, %v783
    %v788 = vpack.c.bf16 %v785, %v784
    %v789 = vpack.c.bf16 %v787, %v786
    %v790 = vld [vmem:[#allocation11] sm:$0xf]
    %v791 = vld [vmem:[#allocation11 + $0x4] sm:$0xf]
    %v792 = vld [vmem:[#allocation11 + $0x8] sm:$0xf]
    %v793 = vld [vmem:[#allocation11 + $0xc] sm:$0xf]
    %v794 = vld [vmem:[#allocation11 + $0x10] sm:$0xf]
    %v795 = vld [vmem:[#allocation11 + $0x14] sm:$0xf]
    %v796 = vld [vmem:[#allocation11 + $0x18] sm:$0xf]
    %v797 = vld [vmem:[#allocation11 + $0x1c] sm:$0xf]
    %v798 = vld [vmem:[#allocation11 + $0x20] sm:$0xf]
    %v799 = vld [vmem:[#allocation11 + $0x24] sm:$0xf]
    %v800 = vld [vmem:[#allocation11 + $0x28] sm:$0xf]
    %v801 = vld [vmem:[#allocation11 + $0x2c] sm:$0xf]
    %v802 = vld [vmem:[#allocation11 + $0x30] sm:$0xf]
    %v803 = vld [vmem:[#allocation11 + $0x34] sm:$0xf]
    %v804 = vld [vmem:[#allocation11 + $0x38] sm:$0xf]
    %v805 = vld [vmem:[#allocation11 + $0x3c] sm:$0xf]
    %v806 = vld [vmem:[%s8] sm:$0x1]
    %v807 = vlaneseq
    %v808 = vshrl.u32 %v807, 7
    %v809 = vsub.s32 0, %v808
    %v810 = vrot.slane %v806, %v809
    %v827 = vunpack.c.l.b16 %v790
    %v828 = vunpack.c.l.b16 %v791
    %v829 = vunpack.c.l.b16 %v792
    %v830 = vunpack.c.l.b16 %v793
    %v831 = vunpack.c.l.b16 %v794
    %v832 = vunpack.c.l.b16 %v795
    %v833 = vunpack.c.l.b16 %v796
    %v834 = vunpack.c.l.b16 %v797
    %v835 = vunpack.c.l.b16 %v798
    %v836 = vunpack.c.l.b16 %v799
    %v837 = vunpack.c.l.b16 %v800
    %v838 = vunpack.c.l.b16 %v801
    %v839 = vunpack.c.l.b16 %v802
    %v840 = vunpack.c.l.b16 %v803
    %v841 = vunpack.c.l.b16 %v804
    %v842 = vunpack.c.l.b16 %v805
    %v843 = vpack.c.b16 %v828, %v827
    %v844 = vpack.c.b16 %v830, %v829
    %v845 = vpack.c.b16 %v832, %v831
    %v846 = vpack.c.b16 %v834, %v833
    %v847 = vpack.c.b16 %v836, %v835
    %v848 = vpack.c.b16 %v838, %v837
    %v849 = vpack.c.b16 %v840, %v839
    %v850 = vpack.c.b16 %v842, %v841
    %859 = vmatprep.subr.bf16.mxu0 0
    %860 = vmatpush1.bf16.msra.mxu0 %v850
    %861 = vmatprep.subr.bf16.mxu0 0
    %862 = vmatpush1.bf16.msra.mxu0 %v849
    %863 = vmatprep.subr.bf16.mxu0 0
    %864 = vmatpush1.bf16.msra.mxu0 %v848
    %865 = vmatprep.subr.bf16.mxu0 0
    %866 = vmatpush1.bf16.msra.mxu0 %v847
    %867 = vmatprep.subr.bf16.mxu0 0
    %868 = vmatpush1.bf16.msra.mxu0 %v846
    %869 = vmatprep.subr.bf16.mxu0 0
    %870 = vmatpush1.bf16.msra.mxu0 %v845
    %871 = vmatprep.subr.bf16.mxu0 0
    %872 = vmatpush1.bf16.msra.mxu0 %v844
    %873 = vmatprep.subr.bf16.mxu0 0
    %874 = vmatpush1.bf16.msra.mxu0 %v843
    %875 = vmatprep.subr.bf16.mxu0 0
    %876 = vmatpush2.bf16.msra.mxu0 0
    %877 = vmatprep.subr.bf16.mxu0 0
    %878 = vmatpush2.bf16.msra.mxu0 0
    %879 = vmatprep.subr.bf16.mxu0 0
    %880 = vmatpush2.bf16.msra.mxu0 0
    %881 = vmatprep.subr.bf16.mxu0 0
    %882 = vmatpush2.bf16.msra.mxu0 0
    %883 = vmatprep.subr.bf16.mxu0 0
    %884 = vmatpush2.bf16.msra.mxu0 0
    %885 = vmatprep.subr.bf16.mxu0 0
    %886 = vmatpush2.bf16.msra.mxu0 0
    %887 = vmatprep.subr.bf16.mxu0 0
    %888 = vmatpush2.bf16.msra.mxu0 0
    %889 = vmatprep.subr.bf16.mxu0 0
    %890 = vmatpush2.bf16.msra.mxu0 0
    %891 = vmatprep.mubr.bf16.mxu0 0
    %892 = vmatmul.mubr.bf16.gmra.mxu0 %v788
    %v893 = vpop.f32.mrf.mxu0
    %v894 = vadd.f32 %v810, %v893
    %v895 = vpop.f32.mrf.mxu0
    %v896 = vpop.f32.mrf.mxu0
    %v897 = vadd.f32 %v810, %v896
    %v898 = vpop.f32.mrf.mxu0
    %899 = vmatprep.mubr.bf16.mxu0 0
    %900 = vmatmul.mubr.bf16.gmra.mxu0 %v789
    %v901 = vpop.f32.mrf.mxu0
    %v902 = vadd.f32 %v810, %v901
    %v903 = vpop.f32.mrf.mxu0
    %v904 = vpop.f32.mrf.mxu0
    %v905 = vadd.f32 %v810, %v904
    %v906 = vpop.f32.mrf.mxu0
    %907 = vdwg.mxu0
    %v908 = vxor.u32 %v894, 2147483648
    %v909 = vxor.u32 %v897, 2147483648
    %v910 = vxor.u32 %v902, 2147483648
    %v911 = vxor.u32 %v905, 2147483648
    %v912 = vmul.f32 %v908, 1.442695
    %v913 = vpow.pop %v912
    %v914 = vmul.f32 %v909, 1.442695
    %v915 = vpow.pop %v914
    %v916 = vmul.f32 %v910, 1.442695
    %v917 = vpow.pop %v916
    %v918 = vmul.f32 %v911, 1.442695
    %v919 = vpow.pop %v918
    %v920 = vadd.f32 %v913, 1.0
    %v921 = vadd.f32 %v915, 1.0
    %v922 = vadd.f32 %v917, 1.0
    %v923 = vadd.f32 %v919, 1.0
    %v924 = vrcp.pop %v920
    %v925 = vmul.f32 1.0, %v924
    %v926 = vrcp.pop %v921
    %v927 = vmul.f32 1.0, %v926
    %v928 = vrcp.pop %v922
    %v929 = vmul.f32 1.0, %v928
    %v930 = vrcp.pop %v923
    %v931 = vmul.f32 1.0, %v930
    %v932 = vmul.f32 %v894, %v925
    %v933 = vmul.f32 %v897, %v927
    %v934 = vmul.f32 %v902, %v929
    %v935 = vmul.f32 %v905, %v931
    %936 = vadd.xlane.f32.xlu0 %v932
    %v937 = vpop.xlane.xlu0 %936
    %938 = vadd.xlane.f32.xlu0 %v933
    %v939 = vpop.xlane.xlu0 %938
    %940 = vadd.xlane.f32.xlu0 %v934
    %v941 = vpop.xlane.xlu0 %940
    %942 = vadd.xlane.f32.xlu0 %v935
    %v943 = vpop.xlane.xlu0 %942
    %v944 = vmul.f32 %v932, %v932
    %v945 = vmul.f32 %v933, %v933
    %v946 = vmul.f32 %v934, %v934
    %v947 = vmul.f32 %v935, %v935
    %948 = vadd.xlane.f32.xlu0 %v944
    %v949 = vpop.xlane.xlu0 %948
    %950 = vadd.xlane.f32.xlu0 %v945
    %v951 = vpop.xlane.xlu0 %950
    %952 = vadd.xlane.f32.xlu0 %v946
    %v953 = vpop.xlane.xlu0 %952
    %954 = vadd.xlane.f32.xlu0 %v947
    %v955 = vpop.xlane.xlu0 %954
    %v956 = vmul.f32 %v937, 0.041666668
    %v957 = vmul.f32 %v939, 0.041666668
    %v958 = vmul.f32 %v941, 0.041666668
    %v959 = vmul.f32 %v943, 0.041666668
    %v960 = vmul.f32 %v949, 0.041666668
    %v961 = vmul.f32 %v951, 0.041666668
    %v962 = vmul.f32 %v953, 0.041666668
    %v963 = vmul.f32 %v955, 0.041666668
    %v964 = vmul.f32 %v956, %v956
    %v965 = vmul.f32 %v957, %v957
    %v966 = vmul.f32 %v958, %v958
    %v967 = vmul.f32 %v959, %v959
    %v968 = vsub.f32 %v960, %v964
    %v969 = vsub.f32 %v961, %v965
    %v970 = vsub.f32 %v962, %v966
    %v971 = vsub.f32 %v963, %v967
    %v972 = vmax.f32 %v968, 0.0
    %v973 = vmax.f32 %v969, 0.0
    %v974 = vmax.f32 %v970, 0.0
    %v975 = vmax.f32 %v971, 0.0
    %v976 = vsub.f32 %v932, %v956
    %v977 = vsub.f32 %v933, %v957
    %v978 = vsub.f32 %v934, %v958
    %v979 = vsub.f32 %v935, %v959
    %v980 = vadd.f32 %v972, 1e-05
    %v981 = vadd.f32 %v973, 1e-05
    %v982 = vadd.f32 %v974, 1e-05
    %v983 = vadd.f32 %v975, 1e-05
    %v984 = vrsqrt.pop %v980
    %v985 = vrsqrt.pop %v981
    %v986 = vrsqrt.pop %v982
    %v987 = vrsqrt.pop %v983
    %v988 = vmul.f32 %v976, %v984
    %v989 = vmul.f32 %v977, %v985
    %v990 = vmul.f32 %v978, %v986
    %v991 = vmul.f32 %v979, %v987
    %v992 = vld [vmem:[%s8 + $0x1] sm:$0x1]
    %v993 = vlaneseq
    %v994 = vshrl.u32 %v993, 7
    %v995 = vsub.s32 0, %v994
    %v996 = vrot.slane %v992, %v995
    %v997 = vmul.f32 %v988, %v996
    %v998 = vmul.f32 %v989, %v996
    %v999 = vmul.f32 %v990, %v996
    %v1000 = vmul.f32 %v991, %v996
    %v1001 = vld [vmem:[%s8 + $0x2] sm:$0x1]
    %v1002 = vlaneseq
    %v1003 = vshrl.u32 %v1002, 7
    %v1004 = vsub.s32 0, %v1003
    %v1005 = vrot.slane %v1001, %v1004
    %v1006 = vadd.f32 %v997, %v1005
    %v1007 = vadd.f32 %v998, %v1005
    %v1008 = vadd.f32 %v999, %v1005
    %v1009 = vadd.f32 %v1000, %v1005
    %v1010 = vadd.f32 %v1006, %v784
    %v1011 = vadd.f32 %v1007, %v785
    %v1012 = vadd.f32 %v1008, %v786
    %v1013 = vadd.f32 %v1009, %v787
    %1014 = vst [vmem:[#allocation13] sm:$0xff] %v1010
    %1015 = vst [vmem:[#allocation13 + $0x8] sm:$0xff] %v1011
    %1016 = vst [vmem:[#allocation13 + $0x10] sm:$0xff] %v1012
    %1017 = vst [vmem:[#allocation13 + $0x18] sm:$0xff] %v1013
    // Predicated region
    $region62: #{tpu_custom_call.1} parent=1 // pred_check
      _
    $region63: #{tpu_custom_call.1} parent=1 // pred_check_branch
      %1019 = sbr.rel (0) target = $region65
    $region64: #{tpu_custom_call.1} parent=1 // pred_region
      %s1021 = ssub.s32 512, 512
      %1022 = vsyncadd [#allocation4], %s1021
      %s1023 = sshll.u32 [#allocation13], 4
      %s1024 = int_to_ptr.vmem [resolvable:$true] %s1023
      %1029 = dma.vmem_to_hbm [thread:$0]  %s1024, 512, %s9, [#allocation4], 128, 128, 8
    $region65: #{tpu_custom_call.1} parent=1 // pred_fallthru
      _
    // Predicated region
    $region66: #{tpu_custom_call.1} parent=1 // pred_check
      _
    $region67: #{tpu_custom_call.1} parent=1 // pred_check_branch
      %1031 = sbr.rel (0) target = $region69
    $region68: #{tpu_custom_call.1} parent=1 // pred_region
      %1032 = dma.done [#allocation4], 512
    $region69: #{tpu_custom_call.1} parent=1 // pred_fallthru
      _
    %1033 = vsyncpa [#allocation3], 1
    %1034 = vsyncpa [#allocation6], 1
    %1035 = vsyncpa [#allocation9], 1
    %1036 = vsyncpa [#allocation12], 1
    %1037 = vsyncpa [#allocation4], 1

// kernel: tpu_custom_call.1
$region0: #{tpu_custom_call.1}
  #allocation0 [shape = 'u32[]', space=smem, size = 0x4, offset = 0x4, fixed_abs, tag = 'smem constant byte address 0x4 - core index']
  #allocation1 [shape = 'u32[144,128]{1,0:T(1,128)}', space=vmem, size = 0x12000, scoped, tag = 'internal scratch']
  %s0 = inlined_call_operand.hbm [shape: f32[32,128], index: 0, kind: input, shape index: {}]
  %s1 = inlined_call_operand.hbm [shape: bf16[128,128], index: 1, kind: input, shape index: {}]
  %s2 = inlined_call_operand.hbm [shape: f32[3,128], index: 2, kind: input, shape index: {}]
  %s3 = inlined_call_operand.hbm [shape: bf16[128,128], index: 3, kind: input, shape index: {}]
  %s4 = inlined_call_operand.vmem [shape: f32[3,128], index: 4, kind: input, shape index: {}]
  %s5 = inlined_call_operand.hbm [shape: bf16[128,128], index: 5, kind: input, shape index: {}]
  %s6 = inlined_call_operand.vmem [shape: f32[3,128], index: 6, kind: input, shape index: {}]
  %s7 = inlined_call_operand.hbm [shape: bf16[128,128], index: 7, kind: input, shape index: {}]
  %s8 = inlined_call_operand.vmem [shape: f32[3,128], index: 8, kind: input, shape index: {}]
  %s9 = inlined_call_operand.hbm [shape: f32[32,128], index: 9, kind: output, shape index: {}]
  %s10 = sld [smem:[#allocation0]]
  $region70: #{tpu_custom_call.1} parent=0
    _
  %s12 = ssub.s32 1, %s10
  %s13 = scalar_select 0, %s12, %s10
  $region1: #{tpu_custom_call.1} parent=0
    #allocation2 [shape = 'u8[16384]{0}', space=vmem, size = 0x4000, scoped, tag = 'input window, operand 0, single buffered']
    #allocation3 [shape = 's32[1]{0}', space=sflag, size = 0x4, scoped, tag = 'scoped memory for tpu_custom_call.1']
    #allocation4 [shape = 's32[1]{0}', space=sflag, size = 0x4, scoped, tag = 'scoped memory for tpu_custom_call.1']
    #allocation5 [shape = 'u8[32768]{0}', space=vmem, size = 0x8000, scoped, tag = 'input window, operand 1, single buffered']
    #allocation6 [shape = 's32[1]{0}', space=sflag, size = 0x4, scoped, tag = 'scoped memory for tpu_custom_call.1']
    #allocation7 [shape = 'u8[2048]{0}', space=vmem, size = 0x800, scoped, tag = 'input window, operand 2, single buffered']
    #allocation8 [shape = 'u8[32768]{0}', space=vmem, size = 0x8000, scoped, tag = 'input window, operand 3, single buffered']
    #allocation9 [shape = 's32[1]{0}', space=sflag, size = 0x4, scoped, tag = 'scoped memory for tpu_custom_call.1']
    #allocation10 [shape = 'u8[32768]{0}', space=vmem, size = 0x8000, scoped, tag = 'input window, operand 5, single buffered']
    #allocation11 [shape = 'u8[32768]{0}', space=vmem, size = 0x8000, scoped, tag = 'input window, operand 7, single buffered']
    #allocation12 [shape = 's32[1]{0}', space=sflag, size = 0x4, scoped, tag = 'scoped memory for tpu_custom_call.1']
    #allocation13 [shape = 'u8[16384]{0}', space=vmem, size = 0x4000, scoped, tag = 'output window, operand 0, single buffered']
    %14 = vsyncpa [#allocation3], 0
    %15 = vsyncpa [#allocation6], 0
    %16 = vsyncpa [#allocation9], 0
    %17 = vsyncpa [#allocation12], 0
    %18 = vsyncpa [#allocation4], 0
    // Predicated region
    $region2: #{tpu_custom_call.1} parent=1 // pred_check
      _
    $region3: #{tpu_custom_call.1} parent=1 // pred_check_branch
      %20 = sbr.rel (0) target = $region5
    $region4: #{tpu_custom_call.1} parent=1 // pred_region
      %s22 = ssub.s32 512, 512
      %23 = vsyncadd [#allocation3], %s22
      %s24 = sshll.u32 [#allocation2], 4
      %s25 = int_to_ptr.vmem [resolvable:$true] %s24
      %30 = dma.hbm_to_vmem [thread:$0]  %s0, 512, %s25, [#allocation3], 128, 128, 8
    $region5: #{tpu_custom_call.1} parent=1 // pred_fallthru
      _
    // Predicated region
    $region6: #{tpu_custom_call.1} parent=1 // pred_check
      _
    $region7: #{tpu_custom_call.1} parent=1 // pred_check_branch
      %32 = sbr.rel (0) target = $region9
    $region8: #{tpu_custom_call.1} parent=1 // pred_region
      %s34 = ssub.s32 1024, 1024
      %35 = vsyncadd [#allocation6], %s34
      %s36 = sshll.u32 [#allocation5], 4
      %s37 = int_to_ptr.vmem [resolvable:$true] %s36
      %42 = dma.hbm_to_vmem [thread:$0]  %s1, 1024, %s37, [#allocation6], 64, 64, 4
    $region9: #{tpu_custom_call.1} parent=1 // pred_fallthru
      _
    // Predicated region
    $region10: #{tpu_custom_call.1} parent=1 // pred_check
      _
    $region11: #{tpu_custom_call.1} parent=1 // pred_check_branch
      %44 = sbr.rel (0) target = $region13
    $region12: #{tpu_custom_call.1} parent=1 // pred_region
      %s46 = ssub.s32 64, 64
      %47 = vsyncadd [#allocation6], %s46
      %s49 = sshll.u32 [#allocation7], 4
      %s50 = int_to_ptr.vmem [resolvable:$true] %s49
      %52 = dma.hbm_to_vmem [thread:$0]  %s2, 64, %s50, [#allocation6]
    $region13: #{tpu_custom_call.1} parent=1 // pred_fallthru
      _
    // Predicated region
    $region14: #{tpu_custom_call.1} parent=1 // pred_check
      _
    $region15: #{tpu_custom_call.1} parent=1 // pred_check_branch
      %54 = sbr.rel (0) target = $region17
    $region16: #{tpu_custom_call.1} parent=1 // pred_region
      %s56 = ssub.s32 1024, 1024
      %57 = vsyncadd [#allocation9], %s56
      %s58 = sshll.u32 [#allocation8], 4
      %s59 = int_to_ptr.vmem [resolvable:$true] %s58
      %64 = dma.hbm_to_vmem [thread:$0]  %s3, 1024, %s59, [#allocation9], 64, 64, 4
    $region17: #{tpu_custom_call.1} parent=1 // pred_fallthru
      _
    // Predicated region
    $region18: #{tpu_custom_call.1} parent=1 // pred_check
      _
    $region19: #{tpu_custom_call.1} parent=1 // pred_check_branch
      %66 = sbr.rel (0) target = $region21
    $region20: #{tpu_custom_call.1} parent=1 // pred_region
      _
    $region21: #{tpu_custom_call.1} parent=1 // pred_fallthru
      _
    // Predicated region
    $region22: #{tpu_custom_call.1} parent=1 // pred_check
      _
    $region23: #{tpu_custom_call.1} parent=1 // pred_check_branch
      %68 = sbr.rel (0) target = $region25
    $region24: #{tpu_custom_call.1} parent=1 // pred_region
      %s70 = ssub.s32 1024, 1024
      %71 = vsyncadd [#allocation9], %s70
      %s72 = sshll.u32 [#allocation10], 4
      %s73 = int_to_ptr.vmem [resolvable:$true] %s72
      %78 = dma.hbm_to_vmem [thread:$0]  %s5, 1024, %s73, [#allocation9], 64, 64, 4
    $region25: #{tpu_custom_call.1} parent=1 // pred_fallthru
      _
    // Predicated region
    $region26: #{tpu_custom_call.1} parent=1 // pred_check
      _
    $region27: #{tpu_custom_call.1} parent=1 // pred_check_branch
      %80 = sbr.rel (0) target = $region29
    $region28: #{tpu_custom_call.1} parent=1 // pred_region
      _
    $region29: #{tpu_custom_call.1} parent=1 // pred_fallthru
      _
    // Predicated region
    $region30: #{tpu_custom_call.1} parent=1 // pred_check
      _
    $region31: #{tpu_custom_call.1} parent=1 // pred_check_branch
      %82 = sbr.rel (0) target = $region33
    $region32: #{tpu_custom_call.1} parent=1 // pred_region
      %s84 = ssub.s32 1024, 1024
      %85 = vsyncadd [#allocation12], %s84
      %s86 = sshll.u32 [#allocation11], 4
      %s87 = int_to_ptr.vmem [resolvable:$true] %s86
      %92 = dma.hbm_to_vmem [thread:$0]  %s7, 1024, %s87, [#allocation12], 64, 64, 4
    $region33: #{tpu_custom_call.1} parent=1 // pred_fallthru
      _
    // Predicated region
    $region34: #{tpu_custom_call.1} parent=1 // pred_check
      _
    $region35: #{tpu_custom_call.1} parent=1 // pred_check_branch
      %94 = sbr.rel (0) target = $region37
    $region36: #{tpu_custom_call.1} parent=1 // pred_region
      _
    $region37: #{tpu_custom_call.1} parent=1 // pred_fallthru
      _
    // Predicated region
    $region38: #{tpu_custom_call.1} parent=1 // pred_check
      _
    $region39: #{tpu_custom_call.1} parent=1 // pred_check_branch
      %96 = sbr.rel (0) target = $region41
    $region40: #{tpu_custom_call.1} parent=1 // pred_region
      %97 = dma.done [#allocation3], 512
    $region41: #{tpu_custom_call.1} parent=1 // pred_fallthru
      _
    // Predicated region
    $region42: #{tpu_custom_call.1} parent=1 // pred_check
      _
    $region43: #{tpu_custom_call.1} parent=1 // pred_check_branch
      %99 = sbr.rel (0) target = $region45
    $region44: #{tpu_custom_call.1} parent=1 // pred_region
      %100 = dma.done [#allocation6], 1024
    $region45: #{tpu_custom_call.1} parent=1 // pred_fallthru
      _
    // Predicated region
    $region46: #{tpu_custom_call.1} parent=1 // pred_check
      _
    $region47: #{tpu_custom_call.1} parent=1 // pred_check_branch
      %102 = sbr.rel (0) target = $region49
    $region48: #{tpu_custom_call.1} parent=1 // pred_region
      %103 = dma.done [#allocation6], 64
    $region49: #{tpu_custom_call.1} parent=1 // pred_fallthru
      _
    // Predicated region
    $region50: #{tpu_custom_call.1} parent=1 // pred_check
      _
    $region51: #{tpu_custom_call.1} parent=1 // pred_check_branch
      %105 = sbr.rel (0) target = $region53
    $region52: #{tpu_custom_call.1} parent=1 // pred_region
      %106 = dma.done [#allocation9], 1024
    $region53: #{tpu_custom_call.1} parent=1 // pred_fallthru
      _
    // Predicated region
    $region54: #{tpu_custom_call.1} parent=1 // pred_check
      _
    $region55: #{tpu_custom_call.1} parent=1 // pred_check_branch
      %108 = sbr.rel (0) target = $region57
    $region56: #{tpu_custom_call.1} parent=1 // pred_region
      %109 = dma.done [#allocation9], 1024
    $region57: #{tpu_custom_call.1} parent=1 // pred_fallthru
      _
    // Predicated region
    $region58: #{tpu_custom_call.1} parent=1 // pred_check
      _
    $region59: #{tpu_custom_call.1} parent=1 // pred_check_branch
      %111 = sbr.rel (0) target = $region61
    $region60: #{tpu_custom_call.1} parent=1 // pred_region
      %112 = dma.done [#allocation12], 1024
    $region61: #{tpu_custom_call.1} parent=1 // pred_fallthru
      _
    %v114 = vld [vmem:[#allocation2] sm:$0xff]
    %v115 = vld [vmem:[#allocation2 + $0x8] sm:$0xff]
    %v116 = vld [vmem:[#allocation2 + $0x10] sm:$0xff]
    %v117 = vld [vmem:[#allocation2 + $0x18] sm:$0xff]
    %v118 = vpack.c.bf16 %v115, %v114
    %v119 = vpack.c.bf16 %v117, %v116
    %v120 = vld [vmem:[#allocation5] sm:$0xf]
    %v121 = vld [vmem:[#allocation5 + $0x4] sm:$0xf]
    %v122 = vld [vmem:[#allocation5 + $0x8] sm:$0xf]
    %v123 = vld [vmem:[#allocation5 + $0xc] sm:$0xf]
    %v124 = vld [vmem:[#allocation5 + $0x10] sm:$0xf]
    %v125 = vld [vmem:[#allocation5 + $0x14] sm:$0xf]
    %v126 = vld [vmem:[#allocation5 + $0x18] sm:$0xf]
    %v127 = vld [vmem:[#allocation5 + $0x1c] sm:$0xf]
    %v128 = vld [vmem:[#allocation5 + $0x20] sm:$0xf]
    %v129 = vld [vmem:[#allocation5 + $0x24] sm:$0xf]
    %v130 = vld [vmem:[#allocation5 + $0x28] sm:$0xf]
    %v131 = vld [vmem:[#allocation5 + $0x2c] sm:$0xf]
    %v132 = vld [vmem:[#allocation5 + $0x30] sm:$0xf]
    %v133 = vld [vmem:[#allocation5 + $0x34] sm:$0xf]
    %v134 = vld [vmem:[#allocation5 + $0x38] sm:$0xf]
    %v135 = vld [vmem:[#allocation5 + $0x3c] sm:$0xf]
    %v136 = vld [vmem:[#allocation7] sm:$0x1]
    %v137 = vlaneseq
    %v138 = vshrl.u32 %v137, 7
    %v139 = vsub.s32 0, %v138
    %v140 = vrot.slane %v136, %v139
    %v157 = vunpack.c.l.b16 %v120
    %v158 = vunpack.c.l.b16 %v121
    %v159 = vunpack.c.l.b16 %v122
    %v160 = vunpack.c.l.b16 %v123
    %v161 = vunpack.c.l.b16 %v124
    %v162 = vunpack.c.l.b16 %v125
    %v163 = vunpack.c.l.b16 %v126
    %v164 = vunpack.c.l.b16 %v127
    %v165 = vunpack.c.l.b16 %v128
    %v166 = vunpack.c.l.b16 %v129
    %v167 = vunpack.c.l.b16 %v130
    %v168 = vunpack.c.l.b16 %v131
    %v169 = vunpack.c.l.b16 %v132
    %v170 = vunpack.c.l.b16 %v133
    %v171 = vunpack.c.l.b16 %v134
    %v172 = vunpack.c.l.b16 %v135
    %v173 = vpack.c.b16 %v158, %v157
    %v174 = vpack.c.b16 %v160, %v159
    %v175 = vpack.c.b16 %v162, %v161
    %v176 = vpack.c.b16 %v164, %v163
    %v177 = vpack.c.b16 %v166, %v165
    %v178 = vpack.c.b16 %v168, %v167
    %v179 = vpack.c.b16 %v170, %v169
    %v180 = vpack.c.b16 %v172, %v171
    %189 = vmatprep.subr.bf16.mxu0 0
    %190 = vmatpush1.bf16.msra.mxu0 %v180
    %191 = vmatprep.subr.bf16.mxu0 0
    %192 = vmatpush1.bf16.msra.mxu0 %v179
    %193 = vmatprep.subr.bf16.mxu0 0
    %194 = vmatpush1.bf16.msra.mxu0 %v178
    %195 = vmatprep.subr.bf16.mxu0 0
    %196 = vmatpush1.bf16.msra.mxu0 %v177
    %197 = vmatprep.subr.bf16.mxu0 0
    %198 = vmatpush1.bf16.msra.mxu0 %v176
    %199 = vmatprep.subr.bf16.mxu0 0
    %200 = vmatpush1.bf16.msra.mxu0 %v175
    %201 = vmatprep.subr.bf16.mxu0 0
    %202 = vmatpush1.bf16.msra.mxu0 %v174
    %203 = vmatprep.subr.bf16.mxu0 0
    %204 = vmatpush1.bf16.msra.mxu0 %v173
    %205 = vmatprep.subr.bf16.mxu0 0
    %206 = vmatpush2.bf16.msra.mxu0 0
    %207 = vmatprep.subr.bf16.mxu0 0
    %208 = vmatpush2.bf16.msra.mxu0 0
    %209 = vmatprep.subr.bf16.mxu0 0
    %210 = vmatpush2.bf16.msra.mxu0 0
    %211 = vmatprep.subr.bf16.mxu0 0
    %212 = vmatpush2.bf16.msra.mxu0 0
    %213 = vmatprep.subr.bf16.mxu0 0
    %214 = vmatpush2.bf16.msra.mxu0 0
    %215 = vmatprep.subr.bf16.mxu0 0
    %216 = vmatpush2.bf16.msra.mxu0 0
    %217 = vmatprep.subr.bf16.mxu0 0
    %218 = vmatpush2.bf16.msra.mxu0 0
    %219 = vmatprep.subr.bf16.mxu0 0
    %220 = vmatpush2.bf16.msra.mxu0 0
    %221 = vmatprep.mubr.bf16.mxu0 0
    %222 = vmatmul.mubr.bf16.gmra.mxu0 %v118
    %v223 = vpop.f32.mrf.mxu0
    %v224 = vadd.f32 %v140, %v223
    %v225 = vpop.f32.mrf.mxu0
    %v226 = vpop.f32.mrf.mxu0
    %v227 = vadd.f32 %v140, %v226
    %v228 = vpop.f32.mrf.mxu0
    %229 = vmatprep.mubr.bf16.mxu0 0
    %230 = vmatmul.mubr.bf16.gmra.mxu0 %v119
    %v231 = vpop.f32.mrf.mxu0
    %v232 = vadd.f32 %v140, %v231
    %v233 = vpop.f32.mrf.mxu0
    %v234 = vpop.f32.mrf.mxu0
    %v235 = vadd.f32 %v140, %v234
    %v236 = vpop.f32.mrf.mxu0
    %237 = vdwg.mxu0
    %v238 = vxor.u32 %v224, 2147483648
    %v239 = vxor.u32 %v227, 2147483648
    %v240 = vxor.u32 %v232, 2147483648
    %v241 = vxor.u32 %v235, 2147483648
    %v242 = vmul.f32 %v238, 1.442695
    %v243 = vpow.pop %v242
    %v244 = vmul.f32 %v239, 1.442695
    %v245 = vpow.pop %v244
    %v246 = vmul.f32 %v240, 1.442695
    %v247 = vpow.pop %v246
    %v248 = vmul.f32 %v241, 1.442695
    %v249 = vpow.pop %v248
    %v250 = vadd.f32 %v243, 1.0
    %v251 = vadd.f32 %v245, 1.0
    %v252 = vadd.f32 %v247, 1.0
    %v253 = vadd.f32 %v249, 1.0
    %v254 = vrcp.pop %v250
    %v255 = vmul.f32 1.0, %v254
    %v256 = vrcp.pop %v251
    %v257 = vmul.f32 1.0, %v256
    %v258 = vrcp.pop %v252
    %v259 = vmul.f32 1.0, %v258
    %v260 = vrcp.pop %v253
    %v261 = vmul.f32 1.0, %v260
    %v262 = vmul.f32 %v224, %v255
    %v263 = vmul.f32 %v227, %v257
    %v264 = vmul.f32 %v232, %v259
    %v265 = vmul.f32 %v235, %v261
    %266 = vadd.xlane.f32.xlu0 %v262
    %v267 = vpop.xlane.xlu0 %266
    %268 = vadd.xlane.f32.xlu0 %v263
    %v269 = vpop.xlane.xlu0 %268
    %270 = vadd.xlane.f32.xlu0 %v264
    %v271 = vpop.xlane.xlu0 %270
    %272 = vadd.xlane.f32.xlu0 %v265
    %v273 = vpop.xlane.xlu0 %272
    %v274 = vmul.f32 %v262, %v262
    %v275 = vmul.f32 %v263, %v263
    %v276 = vmul.f32 %v264, %v264
    %v277 = vmul.f32 %v265, %v265
    %278 = vadd.xlane.f32.xlu0 %v274
    %v279 = vpop.xlane.xlu0 %278
    %280 = vadd.xlane.f32.xlu0 %v275
    %v281 = vpop.xlane.xlu0 %280
    %282 = vadd.xlane.f32.xlu0 %v276
    %v283 = vpop.xlane.xlu0 %282
    %284 = vadd.xlane.f32.xlu0 %v277
    %v285 = vpop.xlane.xlu0 %284
    %v286 = vmul.f32 %v267, 0.020833334
    %v287 = vmul.f32 %v269, 0.020833334
    %v288 = vmul.f32 %v271, 0.020833334
    %v289 = vmul.f32 %v273, 0.020833334
    %v290 = vmul.f32 %v279, 0.020833334
    %v291 = vmul.f32 %v281, 0.020833334
    %v292 = vmul.f32 %v283, 0.020833334
    %v293 = vmul.f32 %v285, 0.020833334
    %v294 = vmul.f32 %v286, %v286
    %v295 = vmul.f32 %v287, %v287
    %v296 = vmul.f32 %v288, %v288
    %v297 = vmul.f32 %v289, %v289
    %v298 = vsub.f32 %v290, %v294
    %v299 = vsub.f32 %v291, %v295
    %v300 = vsub.f32 %v292, %v296
    %v301 = vsub.f32 %v293, %v297
    %v302 = vmax.f32 %v298, 0.0
    %v303 = vmax.f32 %v299, 0.0
    %v304 = vmax.f32 %v300, 0.0
    %v305 = vmax.f32 %v301, 0.0
    %v306 = vsub.f32 %v262, %v286
    %v307 = vsub.f32 %v263, %v287
    %v308 = vsub.f32 %v264, %v288
    %v309 = vsub.f32 %v265, %v289
    %v310 = vadd.f32 %v302, 1e-05
    %v311 = vadd.f32 %v303, 1e-05
    %v312 = vadd.f32 %v304, 1e-05
    %v313 = vadd.f32 %v305, 1e-05
    %v314 = vrsqrt.pop %v310
    %v315 = vrsqrt.pop %v311
    %v316 = vrsqrt.pop %v312
    %v317 = vrsqrt.pop %v313
    %v318 = vmul.f32 %v306, %v314
    %v319 = vmul.f32 %v307, %v315
    %v320 = vmul.f32 %v308, %v316
    %v321 = vmul.f32 %v309, %v317
    %v322 = vld [vmem:[#allocation7 + $0x1] sm:$0x1]
    %v323 = vlaneseq
    %v324 = vshrl.u32 %v323, 7
    %v325 = vsub.s32 0, %v324
    %v326 = vrot.slane %v322, %v325
    %v327 = vmul.f32 %v318, %v326
    %v328 = vmul.f32 %v319, %v326
    %v329 = vmul.f32 %v320, %v326
    %v330 = vmul.f32 %v321, %v326
    %v331 = vld [vmem:[#allocation7 + $0x2] sm:$0x1]
    %v332 = vlaneseq
    %v333 = vshrl.u32 %v332, 7
    %v334 = vsub.s32 0, %v333
    %v335 = vrot.slane %v331, %v334
    %v336 = vadd.f32 %v327, %v335
    %v337 = vadd.f32 %v328, %v335
    %v338 = vadd.f32 %v329, %v335
    %v339 = vadd.f32 %v330, %v335
    %v340 = vpack.c.bf16 %v337, %v336
    %v341 = vpack.c.bf16 %v339, %v338
    %v342 = vld [vmem:[#allocation8] sm:$0xf]
    %v343 = vld [vmem:[#allocation8 + $0x4] sm:$0xf]
    %v344 = vld [vmem:[#allocation8 + $0x8] sm:$0xf]
    %v345 = vld [vmem:[#allocation8 + $0xc] sm:$0xf]
    %v346 = vld [vmem:[#allocation8 + $0x10] sm:$0xf]
    %v347 = vld [vmem:[#allocation8 + $0x14] sm:$0xf]
    %v348 = vld [vmem:[#allocation8 + $0x18] sm:$0xf]
    %v349 = vld [vmem:[#allocation8 + $0x1c] sm:$0xf]
    %v350 = vld [vmem:[#allocation8 + $0x20] sm:$0xf]
    %v351 = vld [vmem:[#allocation8 + $0x24] sm:$0xf]
    %v352 = vld [vmem:[#allocation8 + $0x28] sm:$0xf]
    %v353 = vld [vmem:[#allocation8 + $0x2c] sm:$0xf]
    %v354 = vld [vmem:[#allocation8 + $0x30] sm:$0xf]
    %v355 = vld [vmem:[#allocation8 + $0x34] sm:$0xf]
    %v356 = vld [vmem:[#allocation8 + $0x38] sm:$0xf]
    %v357 = vld [vmem:[#allocation8 + $0x3c] sm:$0xf]
    %v358 = vld [vmem:[%s4] sm:$0x1]
    %v359 = vlaneseq
    %v360 = vshrl.u32 %v359, 7
    %v361 = vsub.s32 0, %v360
    %v362 = vrot.slane %v358, %v361
    %v379 = vunpack.c.l.b16 %v342
    %v380 = vunpack.c.l.b16 %v343
    %v381 = vunpack.c.l.b16 %v344
    %v382 = vunpack.c.l.b16 %v345
    %v383 = vunpack.c.l.b16 %v346
    %v384 = vunpack.c.l.b16 %v347
    %v385 = vunpack.c.l.b16 %v348
    %v386 = vunpack.c.l.b16 %v349
    %v387 = vunpack.c.l.b16 %v350
    %v388 = vunpack.c.l.b16 %v351
    %v389 = vunpack.c.l.b16 %v352
    %v390 = vunpack.c.l.b16 %v353
    %v391 = vunpack.c.l.b16 %v354
    %v392 = vunpack.c.l.b16 %v355
    %v393 = vunpack.c.l.b16 %v356
    %v394 = vunpack.c.l.b16 %v357
    %v395 = vpack.c.b16 %v380, %v379
    %v396 = vpack.c.b16 %v382, %v381
    %v397 = vpack.c.b16 %v384, %v383
    %v398 = vpack.c.b16 %v386, %v385
    %v399 = vpack.c.b16 %v388, %v387
    %v400 = vpack.c.b16 %v390, %v389
    %v401 = vpack.c.b16 %v392, %v391
    %v402 = vpack.c.b16 %v394, %v393
    %411 = vmatprep.subr.bf16.mxu0 0
    %412 = vmatpush1.bf16.msra.mxu0 %v402
    %413 = vmatprep.subr.bf16.mxu0 0
    %414 = vmatpush1.bf16.msra.mxu0 %v401
    %415 = vmatprep.subr.bf16.mxu0 0
    %416 = vmatpush1.bf16.msra.mxu0 %v400
    %417 = vmatprep.subr.bf16.mxu0 0
    %418 = vmatpush1.bf16.msra.mxu0 %v399
    %419 = vmatprep.subr.bf16.mxu0 0
    %420 = vmatpush1.bf16.msra.mxu0 %v398
    %421 = vmatprep.subr.bf16.mxu0 0
    %422 = vmatpush1.bf16.msra.mxu0 %v397
    %423 = vmatprep.subr.bf16.mxu0 0
    %424 = vmatpush1.bf16.msra.mxu0 %v396
    %425 = vmatprep.subr.bf16.mxu0 0
    %426 = vmatpush1.bf16.msra.mxu0 %v395
    %427 = vmatprep.subr.bf16.mxu0 0
    %428 = vmatpush2.bf16.msra.mxu0 0
    %429 = vmatprep.subr.bf16.mxu0 0
    %430 = vmatpush2.bf16.msra.mxu0 0
    %431 = vmatprep.subr.bf16.mxu0 0
    %432 = vmatpush2.bf16.msra.mxu0 0
    %433 = vmatprep.subr.bf16.mxu0 0
    %434 = vmatpush2.bf16.msra.mxu0 0
    %435 = vmatprep.subr.bf16.mxu0 0
    %436 = vmatpush2.bf16.msra.mxu0 0
    %437 = vmatprep.subr.bf16.mxu0 0
    %438 = vmatpush2.bf16.msra.mxu0 0
    %439 = vmatprep.subr.bf16.mxu0 0
    %440 = vmatpush2.bf16.msra.mxu0 0
    %441 = vmatprep.subr.bf16.mxu0 0
    %442 = vmatpush2.bf16.msra.mxu0 0
    %443 = vmatprep.mubr.bf16.mxu0 0
    %444 = vmatmul.mubr.bf16.gmra.mxu0 %v340
    %v445 = vpop.f32.mrf.mxu0
    %v446 = vadd.f32 %v362, %v445
    %v447 = vpop.f32.mrf.mxu0
    %v448 = vpop.f32.mrf.mxu0
    %v449 = vadd.f32 %v362, %v448
    %v450 = vpop.f32.mrf.mxu0
    %451 = vmatprep.mubr.bf16.mxu0 0
    %452 = vmatmul.mubr.bf16.gmra.mxu0 %v341
    %v453 = vpop.f32.mrf.mxu0
    %v454 = vadd.f32 %v362, %v453
    %v455 = vpop.f32.mrf.mxu0
    %v456 = vpop.f32.mrf.mxu0
    %v457 = vadd.f32 %v362, %v456
    %v458 = vpop.f32.mrf.mxu0
    %459 = vdwg.mxu0
    %v460 = vxor.u32 %v446, 2147483648
    %v461 = vxor.u32 %v449, 2147483648
    %v462 = vxor.u32 %v454, 2147483648
    %v463 = vxor.u32 %v457, 2147483648
    %v464 = vmul.f32 %v460, 1.442695
    %v465 = vpow.pop %v464
    %v466 = vmul.f32 %v461, 1.442695
    %v467 = vpow.pop %v466
    %v468 = vmul.f32 %v462, 1.442695
    %v469 = vpow.pop %v468
    %v470 = vmul.f32 %v463, 1.442695
    %v471 = vpow.pop %v470
    %v472 = vadd.f32 %v465, 1.0
    %v473 = vadd.f32 %v467, 1.0
    %v474 = vadd.f32 %v469, 1.0
    %v475 = vadd.f32 %v471, 1.0
    %v476 = vrcp.pop %v472
    %v477 = vmul.f32 1.0, %v476
    %v478 = vrcp.pop %v473
    %v479 = vmul.f32 1.0, %v478
    %v480 = vrcp.pop %v474
    %v481 = vmul.f32 1.0, %v480
    %v482 = vrcp.pop %v475
    %v483 = vmul.f32 1.0, %v482
    %v484 = vmul.f32 %v446, %v477
    %v485 = vmul.f32 %v449, %v479
    %v486 = vmul.f32 %v454, %v481
    %v487 = vmul.f32 %v457, %v483
    %488 = vadd.xlane.f32.xlu0 %v484
    %v489 = vpop.xlane.xlu0 %488
    %490 = vadd.xlane.f32.xlu0 %v485
    %v491 = vpop.xlane.xlu0 %490
    %492 = vadd.xlane.f32.xlu0 %v486
    %v493 = vpop.xlane.xlu0 %492
    %494 = vadd.xlane.f32.xlu0 %v487
    %v495 = vpop.xlane.xlu0 %494
    %v496 = vmul.f32 %v484, %v484
    %v497 = vmul.f32 %v485, %v485
    %v498 = vmul.f32 %v486, %v486
    %v499 = vmul.f32 %v487, %v487
    %500 = vadd.xlane.f32.xlu0 %v496
    %v501 = vpop.xlane.xlu0 %500
    %502 = vadd.xlane.f32.xlu0 %v497
    %v503 = vpop.xlane.xlu0 %502
    %504 = vadd.xlane.f32.xlu0 %v498
    %v505 = vpop.xlane.xlu0 %504
    %506 = vadd.xlane.f32.xlu0 %v499
    %v507 = vpop.xlane.xlu0 %506
    %v508 = vmul.f32 %v489, 0.020833334
    %v509 = vmul.f32 %v491, 0.020833334
    %v510 = vmul.f32 %v493, 0.020833334
    %v511 = vmul.f32 %v495, 0.020833334
    %v512 = vmul.f32 %v501, 0.020833334
    %v513 = vmul.f32 %v503, 0.020833334
    %v514 = vmul.f32 %v505, 0.020833334
    %v515 = vmul.f32 %v507, 0.020833334
    %v516 = vmul.f32 %v508, %v508
    %v517 = vmul.f32 %v509, %v509
    %v518 = vmul.f32 %v510, %v510
    %v519 = vmul.f32 %v511, %v511
    %v520 = vsub.f32 %v512, %v516
    %v521 = vsub.f32 %v513, %v517
    %v522 = vsub.f32 %v514, %v518
    %v523 = vsub.f32 %v515, %v519
    %v524 = vmax.f32 %v520, 0.0
    %v525 = vmax.f32 %v521, 0.0
    %v526 = vmax.f32 %v522, 0.0
    %v527 = vmax.f32 %v523, 0.0
    %v528 = vsub.f32 %v484, %v508
    %v529 = vsub.f32 %v485, %v509
    %v530 = vsub.f32 %v486, %v510
    %v531 = vsub.f32 %v487, %v511
    %v532 = vadd.f32 %v524, 1e-05
    %v533 = vadd.f32 %v525, 1e-05
    %v534 = vadd.f32 %v526, 1e-05
    %v535 = vadd.f32 %v527, 1e-05
    %v536 = vrsqrt.pop %v532
    %v537 = vrsqrt.pop %v533
    %v538 = vrsqrt.pop %v534
    %v539 = vrsqrt.pop %v535
    %v540 = vmul.f32 %v528, %v536
    %v541 = vmul.f32 %v529, %v537
    %v542 = vmul.f32 %v530, %v538
    %v543 = vmul.f32 %v531, %v539
    %v544 = vld [vmem:[%s4 + $0x1] sm:$0x1]
    %v545 = vlaneseq
    %v546 = vshrl.u32 %v545, 7
    %v547 = vsub.s32 0, %v546
    %v548 = vrot.slane %v544, %v547
    %v549 = vmul.f32 %v540, %v548
    %v550 = vmul.f32 %v541, %v548
    %v551 = vmul.f32 %v542, %v548
    %v552 = vmul.f32 %v543, %v548
    %v553 = vld [vmem:[%s4 + $0x2] sm:$0x1]
    %v554 = vlaneseq
    %v555 = vshrl.u32 %v554, 7
    %v556 = vsub.s32 0, %v555
    %v557 = vrot.slane %v553, %v556
    %v558 = vadd.f32 %v549, %v557
    %v559 = vadd.f32 %v550, %v557
    %v560 = vadd.f32 %v551, %v557
    %v561 = vadd.f32 %v552, %v557
    %v562 = vadd.f32 %v558, %v336
    %v563 = vadd.f32 %v559, %v337
    %v564 = vadd.f32 %v560, %v338
    %v565 = vadd.f32 %v561, %v339
    %v566 = vpack.c.bf16 %v563, %v562
    %v567 = vpack.c.bf16 %v565, %v564
    %v568 = vld [vmem:[#allocation10] sm:$0xf]
    %v569 = vld [vmem:[#allocation10 + $0x4] sm:$0xf]
    %v570 = vld [vmem:[#allocation10 + $0x8] sm:$0xf]
    %v571 = vld [vmem:[#allocation10 + $0xc] sm:$0xf]
    %v572 = vld [vmem:[#allocation10 + $0x10] sm:$0xf]
    %v573 = vld [vmem:[#allocation10 + $0x14] sm:$0xf]
    %v574 = vld [vmem:[#allocation10 + $0x18] sm:$0xf]
    %v575 = vld [vmem:[#allocation10 + $0x1c] sm:$0xf]
    %v576 = vld [vmem:[#allocation10 + $0x20] sm:$0xf]
    %v577 = vld [vmem:[#allocation10 + $0x24] sm:$0xf]
    %v578 = vld [vmem:[#allocation10 + $0x28] sm:$0xf]
    %v579 = vld [vmem:[#allocation10 + $0x2c] sm:$0xf]
    %v580 = vld [vmem:[#allocation10 + $0x30] sm:$0xf]
    %v581 = vld [vmem:[#allocation10 + $0x34] sm:$0xf]
    %v582 = vld [vmem:[#allocation10 + $0x38] sm:$0xf]
    %v583 = vld [vmem:[#allocation10 + $0x3c] sm:$0xf]
    %v584 = vld [vmem:[%s6] sm:$0x1]
    %v585 = vlaneseq
    %v586 = vshrl.u32 %v585, 7
    %v587 = vsub.s32 0, %v586
    %v588 = vrot.slane %v584, %v587
    %v605 = vunpack.c.l.b16 %v568
    %v606 = vunpack.c.l.b16 %v569
    %v607 = vunpack.c.l.b16 %v570
    %v608 = vunpack.c.l.b16 %v571
    %v609 = vunpack.c.l.b16 %v572
    %v610 = vunpack.c.l.b16 %v573
    %v611 = vunpack.c.l.b16 %v574
    %v612 = vunpack.c.l.b16 %v575
    %v613 = vunpack.c.l.b16 %v576
    %v614 = vunpack.c.l.b16 %v577
    %v615 = vunpack.c.l.b16 %v578
    %v616 = vunpack.c.l.b16 %v579
    %v617 = vunpack.c.l.b16 %v580
    %v618 = vunpack.c.l.b16 %v581
    %v619 = vunpack.c.l.b16 %v582
    %v620 = vunpack.c.l.b16 %v583
    %v621 = vpack.c.b16 %v606, %v605
    %v622 = vpack.c.b16 %v608, %v607
    %v623 = vpack.c.b16 %v610, %v609
    %v624 = vpack.c.b16 %v612, %v611
    %v625 = vpack.c.b16 %v614, %v613
    %v626 = vpack.c.b16 %v616, %v615
    %v627 = vpack.c.b16 %v618, %v617
    %v628 = vpack.c.b16 %v620, %v619
    %637 = vmatprep.subr.bf16.mxu0 0
    %638 = vmatpush1.bf16.msra.mxu0 %v628
    %639 = vmatprep.subr.bf16.mxu0 0
    %640 = vmatpush1.bf16.msra.mxu0 %v627
    %641 = vmatprep.subr.bf16.mxu0 0
    %642 = vmatpush1.bf16.msra.mxu0 %v626
    %643 = vmatprep.subr.bf16.mxu0 0
    %644 = vmatpush1.bf16.msra.mxu0 %v625
    %645 = vmatprep.subr.bf16.mxu0 0
    %646 = vmatpush1.bf16.msra.mxu0 %v624
    %647 = vmatprep.subr.bf16.mxu0 0
    %648 = vmatpush1.bf16.msra.mxu0 %v623
    %649 = vmatprep.subr.bf16.mxu0 0
    %650 = vmatpush1.bf16.msra.mxu0 %v622
    %651 = vmatprep.subr.bf16.mxu0 0
    %652 = vmatpush1.bf16.msra.mxu0 %v621
    %653 = vmatprep.subr.bf16.mxu0 0
    %654 = vmatpush2.bf16.msra.mxu0 0
    %655 = vmatprep.subr.bf16.mxu0 0
    %656 = vmatpush2.bf16.msra.mxu0 0
    %657 = vmatprep.subr.bf16.mxu0 0
    %658 = vmatpush2.bf16.msra.mxu0 0
    %659 = vmatprep.subr.bf16.mxu0 0
    %660 = vmatpush2.bf16.msra.mxu0 0
    %661 = vmatprep.subr.bf16.mxu0 0
    %662 = vmatpush2.bf16.msra.mxu0 0
    %663 = vmatprep.subr.bf16.mxu0 0
    %664 = vmatpush2.bf16.msra.mxu0 0
    %665 = vmatprep.subr.bf16.mxu0 0
    %666 = vmatpush2.bf16.msra.mxu0 0
    %667 = vmatprep.subr.bf16.mxu0 0
    %668 = vmatpush2.bf16.msra.mxu0 0
    %669 = vmatprep.mubr.bf16.mxu0 0
    %670 = vmatmul.mubr.bf16.gmra.mxu0 %v566
    %v671 = vpop.f32.mrf.mxu0
    %v672 = vadd.f32 %v588, %v671
    %v673 = vpop.f32.mrf.mxu0
    %v674 = vpop.f32.mrf.mxu0
    %v675 = vadd.f32 %v588, %v674
    %v676 = vpop.f32.mrf.mxu0
    %677 = vmatprep.mubr.bf16.mxu0 0
    %678 = vmatmul.mubr.bf16.gmra.mxu0 %v567
    %v679 = vpop.f32.mrf.mxu0
    %v680 = vadd.f32 %v588, %v679
    %v681 = vpop.f32.mrf.mxu0
    %v682 = vpop.f32.mrf.mxu0
    %v683 = vadd.f32 %v588, %v682
    %v684 = vpop.f32.mrf.mxu0
    %685 = vdwg.mxu0
    %v686 = vxor.u32 %v672, 2147483648
    %v687 = vxor.u32 %v675, 2147483648
    %v688 = vxor.u32 %v680, 2147483648
    %v689 = vxor.u32 %v683, 2147483648
    %v690 = vmul.f32 %v686, 1.442695
    %v691 = vpow.pop %v690
    %v692 = vmul.f32 %v687, 1.442695
    %v693 = vpow.pop %v692
    %v694 = vmul.f32 %v688, 1.442695
    %v695 = vpow.pop %v694
    %v696 = vmul.f32 %v689, 1.442695
    %v697 = vpow.pop %v696
    %v698 = vadd.f32 %v691, 1.0
    %v699 = vadd.f32 %v693, 1.0
    %v700 = vadd.f32 %v695, 1.0
    %v701 = vadd.f32 %v697, 1.0
    %v702 = vrcp.pop %v698
    %v703 = vmul.f32 1.0, %v702
    %v704 = vrcp.pop %v699
    %v705 = vmul.f32 1.0, %v704
    %v706 = vrcp.pop %v700
    %v707 = vmul.f32 1.0, %v706
    %v708 = vrcp.pop %v701
    %v709 = vmul.f32 1.0, %v708
    %v710 = vmul.f32 %v672, %v703
    %v711 = vmul.f32 %v675, %v705
    %v712 = vmul.f32 %v680, %v707
    %v713 = vmul.f32 %v683, %v709
    %714 = vadd.xlane.f32.xlu0 %v710
    %v715 = vpop.xlane.xlu0 %714
    %716 = vadd.xlane.f32.xlu0 %v711
    %v717 = vpop.xlane.xlu0 %716
    %718 = vadd.xlane.f32.xlu0 %v712
    %v719 = vpop.xlane.xlu0 %718
    %720 = vadd.xlane.f32.xlu0 %v713
    %v721 = vpop.xlane.xlu0 %720
    %v722 = vmul.f32 %v710, %v710
    %v723 = vmul.f32 %v711, %v711
    %v724 = vmul.f32 %v712, %v712
    %v725 = vmul.f32 %v713, %v713
    %726 = vadd.xlane.f32.xlu0 %v722
    %v727 = vpop.xlane.xlu0 %726
    %728 = vadd.xlane.f32.xlu0 %v723
    %v729 = vpop.xlane.xlu0 %728
    %730 = vadd.xlane.f32.xlu0 %v724
    %v731 = vpop.xlane.xlu0 %730
    %732 = vadd.xlane.f32.xlu0 %v725
    %v733 = vpop.xlane.xlu0 %732
    %v734 = vmul.f32 %v715, 0.041666668
    %v735 = vmul.f32 %v717, 0.041666668
    %v736 = vmul.f32 %v719, 0.041666668
    %v737 = vmul.f32 %v721, 0.041666668
    %v738 = vmul.f32 %v727, 0.041666668
    %v739 = vmul.f32 %v729, 0.041666668
    %v740 = vmul.f32 %v731, 0.041666668
    %v741 = vmul.f32 %v733, 0.041666668
    %v742 = vmul.f32 %v734, %v734
    %v743 = vmul.f32 %v735, %v735
    %v744 = vmul.f32 %v736, %v736
    %v745 = vmul.f32 %v737, %v737
    %v746 = vsub.f32 %v738, %v742
    %v747 = vsub.f32 %v739, %v743
    %v748 = vsub.f32 %v740, %v744
    %v749 = vsub.f32 %v741, %v745
    %v750 = vmax.f32 %v746, 0.0
    %v751 = vmax.f32 %v747, 0.0
    %v752 = vmax.f32 %v748, 0.0
    %v753 = vmax.f32 %v749, 0.0
    %v754 = vsub.f32 %v710, %v734
    %v755 = vsub.f32 %v711, %v735
    %v756 = vsub.f32 %v712, %v736
    %v757 = vsub.f32 %v713, %v737
    %v758 = vadd.f32 %v750, 1e-05
    %v759 = vadd.f32 %v751, 1e-05
    %v760 = vadd.f32 %v752, 1e-05
    %v761 = vadd.f32 %v753, 1e-05
    %v762 = vrsqrt.pop %v758
    %v763 = vrsqrt.pop %v759
    %v764 = vrsqrt.pop %v760
    %v765 = vrsqrt.pop %v761
    %v766 = vmul.f32 %v754, %v762
    %v767 = vmul.f32 %v755, %v763
    %v768 = vmul.f32 %v756, %v764
    %v769 = vmul.f32 %v757, %v765
    %v770 = vld [vmem:[%s6 + $0x1] sm:$0x1]
    %v771 = vlaneseq
    %v772 = vshrl.u32 %v771, 7
    %v773 = vsub.s32 0, %v772
    %v774 = vrot.slane %v770, %v773
    %v775 = vmul.f32 %v766, %v774
    %v776 = vmul.f32 %v767, %v774
    %v777 = vmul.f32 %v768, %v774
    %v778 = vmul.f32 %v769, %v774
    %v779 = vld [vmem:[%s6 + $0x2] sm:$0x1]
    %v780 = vlaneseq
    %v781 = vshrl.u32 %v780, 7
    %v782 = vsub.s32 0, %v781
    %v783 = vrot.slane %v779, %v782
    %v784 = vadd.f32 %v775, %v783
    %v785 = vadd.f32 %v776, %v783
    %v786 = vadd.f32 %v777, %v783
    %v787 = vadd.f32 %v778, %v783
    %v788 = vpack.c.bf16 %v785, %v784
    %v789 = vpack.c.bf16 %v787, %v786
    %v790 = vld [vmem:[#allocation11] sm:$0xf]
    %v791 = vld [vmem:[#allocation11 + $0x4] sm:$0xf]
    %v792 = vld [vmem:[#allocation11 + $0x8] sm:$0xf]
    %v793 = vld [vmem:[#allocation11 + $0xc] sm:$0xf]
    %v794 = vld [vmem:[#allocation11 + $0x10] sm:$0xf]
    %v795 = vld [vmem:[#allocation11 + $0x14] sm:$0xf]
    %v796 = vld [vmem:[#allocation11 + $0x18] sm:$0xf]
    %v797 = vld [vmem:[#allocation11 + $0x1c] sm:$0xf]
    %v798 = vld [vmem:[#allocation11 + $0x20] sm:$0xf]
    %v799 = vld [vmem:[#allocation11 + $0x24] sm:$0xf]
    %v800 = vld [vmem:[#allocation11 + $0x28] sm:$0xf]
    %v801 = vld [vmem:[#allocation11 + $0x2c] sm:$0xf]
    %v802 = vld [vmem:[#allocation11 + $0x30] sm:$0xf]
    %v803 = vld [vmem:[#allocation11 + $0x34] sm:$0xf]
    %v804 = vld [vmem:[#allocation11 + $0x38] sm:$0xf]
    %v805 = vld [vmem:[#allocation11 + $0x3c] sm:$0xf]
    %v806 = vld [vmem:[%s8] sm:$0x1]
    %v807 = vlaneseq
    %v808 = vshrl.u32 %v807, 7
    %v809 = vsub.s32 0, %v808
    %v810 = vrot.slane %v806, %v809
    %v827 = vunpack.c.l.b16 %v790
    %v828 = vunpack.c.l.b16 %v791
    %v829 = vunpack.c.l.b16 %v792
    %v830 = vunpack.c.l.b16 %v793
    %v831 = vunpack.c.l.b16 %v794
    %v832 = vunpack.c.l.b16 %v795
    %v833 = vunpack.c.l.b16 %v796
    %v834 = vunpack.c.l.b16 %v797
    %v835 = vunpack.c.l.b16 %v798
    %v836 = vunpack.c.l.b16 %v799
    %v837 = vunpack.c.l.b16 %v800
    %v838 = vunpack.c.l.b16 %v801
    %v839 = vunpack.c.l.b16 %v802
    %v840 = vunpack.c.l.b16 %v803
    %v841 = vunpack.c.l.b16 %v804
    %v842 = vunpack.c.l.b16 %v805
    %v843 = vpack.c.b16 %v828, %v827
    %v844 = vpack.c.b16 %v830, %v829
    %v845 = vpack.c.b16 %v832, %v831
    %v846 = vpack.c.b16 %v834, %v833
    %v847 = vpack.c.b16 %v836, %v835
    %v848 = vpack.c.b16 %v838, %v837
    %v849 = vpack.c.b16 %v840, %v839
    %v850 = vpack.c.b16 %v842, %v841
    %859 = vmatprep.subr.bf16.mxu0 0
    %860 = vmatpush1.bf16.msra.mxu0 %v850
    %861 = vmatprep.subr.bf16.mxu0 0
    %862 = vmatpush1.bf16.msra.mxu0 %v849
    %863 = vmatprep.subr.bf16.mxu0 0
    %864 = vmatpush1.bf16.msra.mxu0 %v848
    %865 = vmatprep.subr.bf16.mxu0 0
    %866 = vmatpush1.bf16.msra.mxu0 %v847
    %867 = vmatprep.subr.bf16.mxu0 0
    %868 = vmatpush1.bf16.msra.mxu0 %v846
    %869 = vmatprep.subr.bf16.mxu0 0
    %870 = vmatpush1.bf16.msra.mxu0 %v845
    %871 = vmatprep.subr.bf16.mxu0 0
    %872 = vmatpush1.bf16.msra.mxu0 %v844
    %873 = vmatprep.subr.bf16.mxu0 0
    %874 = vmatpush1.bf16.msra.mxu0 %v843
    %875 = vmatprep.subr.bf16.mxu0 0
    %876 = vmatpush2.bf16.msra.mxu0 0
    %877 = vmatprep.subr.bf16.mxu0 0
    %878 = vmatpush2.bf16.msra.mxu0 0
    %879 = vmatprep.subr.bf16.mxu0 0
    %880 = vmatpush2.bf16.msra.mxu0 0
    %881 = vmatprep.subr.bf16.mxu0 0
    %882 = vmatpush2.bf16.msra.mxu0 0
    %883 = vmatprep.subr.bf16.mxu0 0
    %884 = vmatpush2.bf16.msra.mxu0 0
    %885 = vmatprep.subr.bf16.mxu0 0
    %886 = vmatpush2.bf16.msra.mxu0 0
    %887 = vmatprep.subr.bf16.mxu0 0
    %888 = vmatpush2.bf16.msra.mxu0 0
    %889 = vmatprep.subr.bf16.mxu0 0
    %890 = vmatpush2.bf16.msra.mxu0 0
    %891 = vmatprep.mubr.bf16.mxu0 0
    %892 = vmatmul.mubr.bf16.gmra.mxu0 %v788
    %v893 = vpop.f32.mrf.mxu0
    %v894 = vadd.f32 %v810, %v893
    %v895 = vpop.f32.mrf.mxu0
    %v896 = vpop.f32.mrf.mxu0
    %v897 = vadd.f32 %v810, %v896
    %v898 = vpop.f32.mrf.mxu0
    %899 = vmatprep.mubr.bf16.mxu0 0
    %900 = vmatmul.mubr.bf16.gmra.mxu0 %v789
    %v901 = vpop.f32.mrf.mxu0
    %v902 = vadd.f32 %v810, %v901
    %v903 = vpop.f32.mrf.mxu0
    %v904 = vpop.f32.mrf.mxu0
    %v905 = vadd.f32 %v810, %v904
    %v906 = vpop.f32.mrf.mxu0
    %907 = vdwg.mxu0
    %v908 = vxor.u32 %v894, 2147483648
    %v909 = vxor.u32 %v897, 2147483648
    %v910 = vxor.u32 %v902, 2147483648
    %v911 = vxor.u32 %v905, 2147483648
    %v912 = vmul.f32 %v908, 1.442695
    %v913 = vpow.pop %v912
    %v914 = vmul.f32 %v909, 1.442695
    %v915 = vpow.pop %v914
    %v916 = vmul.f32 %v910, 1.442695
    %v917 = vpow.pop %v916
    %v918 = vmul.f32 %v911, 1.442695
    %v919 = vpow.pop %v918
    %v920 = vadd.f32 %v913, 1.0
    %v921 = vadd.f32 %v915, 1.0
    %v922 = vadd.f32 %v917, 1.0
    %v923 = vadd.f32 %v919, 1.0
    %v924 = vrcp.pop %v920
    %v925 = vmul.f32 1.0, %v924
    %v926 = vrcp.pop %v921
    %v927 = vmul.f32 1.0, %v926
    %v928 = vrcp.pop %v922
    %v929 = vmul.f32 1.0, %v928
    %v930 = vrcp.pop %v923
    %v931 = vmul.f32 1.0, %v930
    %v932 = vmul.f32 %v894, %v925
    %v933 = vmul.f32 %v897, %v927
    %v934 = vmul.f32 %v902, %v929
    %v935 = vmul.f32 %v905, %v931
    %936 = vadd.xlane.f32.xlu0 %v932
    %v937 = vpop.xlane.xlu0 %936
    %938 = vadd.xlane.f32.xlu0 %v933
    %v939 = vpop.xlane.xlu0 %938
    %940 = vadd.xlane.f32.xlu0 %v934
    %v941 = vpop.xlane.xlu0 %940
    %942 = vadd.xlane.f32.xlu0 %v935
    %v943 = vpop.xlane.xlu0 %942
    %v944 = vmul.f32 %v932, %v932
    %v945 = vmul.f32 %v933, %v933
    %v946 = vmul.f32 %v934, %v934
    %v947 = vmul.f32 %v935, %v935
    %948 = vadd.xlane.f32.xlu0 %v944
    %v949 = vpop.xlane.xlu0 %948
    %950 = vadd.xlane.f32.xlu0 %v945
    %v951 = vpop.xlane.xlu0 %950
    %952 = vadd.xlane.f32.xlu0 %v946
    %v953 = vpop.xlane.xlu0 %952
    %954 = vadd.xlane.f32.xlu0 %v947
    %v955 = vpop.xlane.xlu0 %954
    %v956 = vmul.f32 %v937, 0.041666668
    %v957 = vmul.f32 %v939, 0.041666668
    %v958 = vmul.f32 %v941, 0.041666668
    %v959 = vmul.f32 %v943, 0.041666668
    %v960 = vmul.f32 %v949, 0.041666668
    %v961 = vmul.f32 %v951, 0.041666668
    %v962 = vmul.f32 %v953, 0.041666668
    %v963 = vmul.f32 %v955, 0.041666668
    %v964 = vmul.f32 %v956, %v956
    %v965 = vmul.f32 %v957, %v957
    %v966 = vmul.f32 %v958, %v958
    %v967 = vmul.f32 %v959, %v959
    %v968 = vsub.f32 %v960, %v964
    %v969 = vsub.f32 %v961, %v965
    %v970 = vsub.f32 %v962, %v966
    %v971 = vsub.f32 %v963, %v967
    %v972 = vmax.f32 %v968, 0.0
    %v973 = vmax.f32 %v969, 0.0
    %v974 = vmax.f32 %v970, 0.0
    %v975 = vmax.f32 %v971, 0.0
    %v976 = vsub.f32 %v932, %v956
    %v977 = vsub.f32 %v933, %v957
    %v978 = vsub.f32 %v934, %v958
    %v979 = vsub.f32 %v935, %v959
    %v980 = vadd.f32 %v972, 1e-05
    %v981 = vadd.f32 %v973, 1e-05
    %v982 = vadd.f32 %v974, 1e-05
    %v983 = vadd.f32 %v975, 1e-05
    %v984 = vrsqrt.pop %v980
    %v985 = vrsqrt.pop %v981
    %v986 = vrsqrt.pop %v982
    %v987 = vrsqrt.pop %v983
    %v988 = vmul.f32 %v976, %v984
    %v989 = vmul.f32 %v977, %v985
    %v990 = vmul.f32 %v978, %v986
    %v991 = vmul.f32 %v979, %v987
    %v992 = vld [vmem:[%s8 + $0x1] sm:$0x1]
    %v993 = vlaneseq
    %v994 = vshrl.u32 %v993, 7
    %v995 = vsub.s32 0, %v994
    %v996 = vrot.slane %v992, %v995
    %v997 = vmul.f32 %v988, %v996
    %v998 = vmul.f32 %v989, %v996
    %v999 = vmul.f32 %v990, %v996
    %v1000 = vmul.f32 %v991, %v996
    %v1001 = vld [vmem:[%s8 + $0x2] sm:$0x1]
    %v1002 = vlaneseq
    %v1003 = vshrl.u32 %v1002, 7
    %v1004 = vsub.s32 0, %v1003
    %v1005 = vrot.slane %v1001, %v1004
    %v1006 = vadd.f32 %v997, %v1005
    %v1007 = vadd.f32 %v998, %v1005
    %v1008 = vadd.f32 %v999, %v1005
    %v1009 = vadd.f32 %v1000, %v1005
    %v1010 = vadd.f32 %v1006, %v784
    %v1011 = vadd.f32 %v1007, %v785
    %v1012 = vadd.f32 %v1008, %v786
    %v1013 = vadd.f32 %v1009, %v787
    %1014 = vst [vmem:[#allocation13] sm:$0xff] %v1010
    %1015 = vst [vmem:[#allocation13 + $0x8] sm:$0xff] %v1011
    %1016 = vst [vmem:[#allocation13 + $0x10] sm:$0xff] %v1012
    %1017 = vst [vmem:[#allocation13 + $0x18] sm:$0xff] %v1013
    // Predicated region
    $region62: #{tpu_custom_call.1} parent=1 // pred_check
      _
    $region63: #{tpu_custom_call.1} parent=1 // pred_check_branch
      %1019 = sbr.rel (0) target = $region65
    $region64: #{tpu_custom_call.1} parent=1 // pred_region
      %s1021 = ssub.s32 512, 512
      %1022 = vsyncadd [#allocation4], %s1021
      %s1023 = sshll.u32 [#allocation13], 4
      %s1024 = int_to_ptr.vmem [resolvable:$true] %s1023
      %1029 = dma.vmem_to_hbm [thread:$0]  %s1024, 512, %s9, [#allocation4], 128, 128, 8
    $region65: #{tpu_custom_call.1} parent=1 // pred_fallthru
      _
    // Predicated region
    $region66: #{tpu_custom_call.1} parent=1 // pred_check
      _
    $region67: #{tpu_custom_call.1} parent=1 // pred_check_branch
      %1031 = sbr.rel (0) target = $region69
    $region68: #{tpu_custom_call.1} parent=1 // pred_region
      %1032 = dma.done [#allocation4], 512
    $region69: #{tpu_custom_call.1} parent=1 // pred_fallthru
      _
    %1033 = vsyncpa [#allocation3], 1
    %1034 = vsyncpa [#allocation6], 1
    %1035 = vsyncpa [#allocation9], 1
    %1036 = vsyncpa [#allocation12], 1
    %1037 = vsyncpa [#allocation4], 1

</llo_original>
